<compile_context>
chip_gen: v7x
topology: tpu7x:2x2x1
jax: 0.10.0
libtpu: 0.0.40
codegen_flags: <defaults>
</compile_context>

<pallas_src>
import math
import functools

import jax
import jax.numpy as jnp
from jax.experimental import pallas as pl
from jax.experimental.pallas import tpu as pltpu


def _round_up(x, m):
    return ((x + m - 1) // m) * m


def _layernorm(x, w, b, eps=1e-5):
    mu = jnp.mean(x, axis=-1, keepdims=True)
    var = jnp.mean(jnp.square(x - mu), axis=-1, keepdims=True)
    return (x - mu) * jax.lax.rsqrt(var + eps) * w + b


# ---------------------------------------------------------------------------
# Fused encoder-stack kernel: grid = (row_tiles, nlayers)
#   - activation lives in the output block (constant index along the layer axis)
#   - per-layer weights block-indexed by the layer id -> layer l+1 weights
#     prefetch while layer l computes
# ---------------------------------------------------------------------------

def encoder_stack_kernel(x_ref, mask_ref,
                         wqkv_ref, bqkv_ref, wo_ref, bo_ref,
                         w1_ref, b1_ref, w2_ref, b2_ref,
                         ln1w_ref, ln1b_ref, ln2w_ref, ln2b_ref,
                         o_ref, *, batch, seq, nhead):
    layer = pl.program_id(1)

    @pl.when(layer == 0)
    def _():
        o_ref[...] = x_ref[...]

    x = o_ref[...]                               # (N, D) f32, rows are batch-major
    n_rows, d_model = x.shape
    d_head = d_model // nhead

    xb = x.astype(jnp.bfloat16)                  # bf16 MXU operands, f32 accum

    # ---- fused QKV projection: one lane-dense (N,D)x(D,3D) matmul ------------
    # (1/sqrt(d_head) is pre-folded into the q columns of wqkv/bqkv at init)
    qkv = jnp.dot(xb, wqkv_ref[...], preferred_element_type=jnp.float32) + bqkv_ref[...]
    q = qkv[:, :d_model].reshape(batch, seq, d_model).astype(jnp.bfloat16)
    k = qkv[:, d_model:2 * d_model].reshape(batch, seq, d_model).astype(jnp.bfloat16)
    v = qkv[:, 2 * d_model:].reshape(batch, seq, d_model).astype(jnp.bfloat16)

    # hoisted mask broadcast (done once per layer, not once per head)
    mask_b = jnp.broadcast_to(mask_ref[...][None, :, :], (batch, seq, seq))

    # ---- attention core (Dh-wide matmuls are inherent to MHA) ----------------
    # TODO(synk): for lane-dense score tensors at small S (<128), pad the key
    # length to a multiple of 128 and extend the additive mask over the padding.
    ctx_heads = []
    for h in range(nhead):
        lo, hi = h * d_head, (h + 1) * d_head
        qh, kh, vh = q[:, :, lo:hi], k[:, :, lo:hi], v[:, :, lo:hi]
        s = jnp.einsum('bqd,bkd->bqk', qh, kh,
                       preferred_element_type=jnp.float32)
        s = s + mask_b
        s = s - jnp.max(s, axis=-1, keepdims=True)       # f32 softmax
        p = jnp.exp(s)
        p = p * pl.reciprocal(jnp.sum(p, axis=-1, keepdims=True), approx=True)
        ctx = jnp.einsum('bqk,bkd->bqd', p.astype(jnp.bfloat16), vh,
                         preferred_element_type=jnp.float32)     # (B, S, Dh)
        ctx_heads.append(ctx.reshape(batch * seq, d_head))
    ctx2d = jnp.concatenate(ctx_heads, axis=-1).astype(jnp.bfloat16)   # (N, D)

    # ---- single full-width output projection ---------------------------------
    attn_out = jnp.dot(ctx2d, wo_ref[...],
                       preferred_element_type=jnp.float32) + bo_ref[...]

    # residual + LayerNorm1 (post-LN, PyTorch default), f32
    y = _layernorm(x + attn_out, ln1w_ref[...], ln1b_ref[...])

    # feed-forward (d_hid zero-padded to a multiple of 128 -> numerically exact)
    h1 = jnp.maximum(
        jnp.dot(y.astype(jnp.bfloat16), w1_ref[...],
                preferred_element_type=jnp.float32) + b1_ref[...], 0.0)
    h2 = jnp.dot(h1.astype(jnp.bfloat16), w2_ref[...],
                 preferred_element_type=jnp.float32) + b2_ref[...]

    o_ref[...] = _layernorm(y + h2, ln2w_ref[...], ln2b_ref[...])


def encoder_stack_call(x2d, mask, layers, *, nhead, batch, seq):
    n_rows, d_model = x2d.shape
    nlayers = layers["wqkv"].shape[0]
    hid_p = layers["w1"].shape[-1]
    s_len = mask.shape[0]

    # Row (whole-batch) tiling policy:
    #  - small activations: keep one resident block (best on v5e/v6e 128 MiB VMEM,
    #    avoids per-grid-step overhead);
    #  - large activations: ~1024-row tiles so the block + f32 FFN intermediate +
    #    double-buffered layer weights fit v7x's 64 MiB VMEM, and the "parallel"
    #    row axis can shard across v7x's two TensorCores.
    # TODO(synk): sweep rows-per-tile per TPU generation and tile the FFN over
    # hid_p columns (accumulating h2) once d_hid is large enough to dominate VMEM.
    if n_rows <= 1024:
        batch_per_tile = batch
    else:
        batch_per_tile = max(1, min(batch, max(1, 1024 // seq)))
        while batch % batch_per_tile:
            batch_per_tile -= 1
    b_tiles = batch // batch_per_tile
    rows_tile = batch_per_tile * seq

    def stacked_spec(*tail):
        n = len(tail)
        # leading layer dim squeezed; block index == layer id -> weight prefetch
        return pl.BlockSpec((None,) + tail, lambda r, l, n=n: (l,) + (0,) * n)

    in_specs = [
        pl.BlockSpec((rows_tile, d_model), lambda r, l: (r, 0)),   # x (row tile)
        pl.BlockSpec((s_len, s_len), lambda r, l: (0, 0)),         # mask (resident)
        stacked_spec(d_model, 3 * d_model),                        # wqkv
        stacked_spec(1, 3 * d_model),                              # bqkv
        stacked_spec(d_model, d_model),                            # wo
        stacked_spec(1, d_model),                                  # bo
        stacked_spec(d_model, hid_p),                              # w1
        stacked_spec(1, hid_p),                                    # b1
        stacked_spec(hid_p, d_model),                              # w2
        stacked_spec(1, d_model),                                  # b2
        stacked_spec(1, d_model),                                  # ln1w
        stacked_spec(1, d_model),                                  # ln1b
        stacked_spec(1, d_model),                                  # ln2w
        stacked_spec(1, d_model),                                  # ln2b
    ]

    return pl.pallas_call(
        functools.partial(encoder_stack_kernel,
                          batch=batch_per_tile, seq=seq, nhead=nhead),
        out_shape=jax.ShapeDtypeStruct((n_rows, d_model), jnp.float32),
        grid=(b_tiles, nlayers),
        in_specs=in_specs,
        out_specs=pl.BlockSpec((rows_tile, d_model), lambda r, l: (r, 0)),
        compiler_params=pltpu.CompilerParams(
            dimension_semantics=("parallel", "arbitrary"),   # rows ||, layers seq
            vmem_limit_bytes=48 * 1024 * 1024),
    )(x2d, mask,
      layers["wqkv"], layers["bqkv"], layers["wo"], layers["bo"],
      layers["w1"], layers["b1"], layers["w2"], layers["b2"],
      layers["ln1w"], layers["ln1b"], layers["ln2w"], layers["ln2b"])


# ---------------------------------------------------------------------------
# Decoder: Linear(d_model -> ntoken), tiled over lane-dense vocab columns
# ---------------------------------------------------------------------------

def decoder_kernel(x_ref, w_ref, b_ref, o_ref):
    o_ref[...] = jnp.dot(x_ref[...].astype(jnp.bfloat16), w_ref[...],
                         preferred_element_type=jnp.float32) + b_ref[...]


def decoder_call(x2d, dec_w, dec_b):
    n_rows, d_model = x2d.shape
    v_pad = dec_w.shape[1]
    tile_v = min(512, v_pad)    # 512-wide tiles ~85% of HBM roofline at big vocab
    # TODO(synk): for very large vocab, quantize dec_w (int8 on v5e/v6e, fp8 on
    # v7x) with per-column scales; the decoder is weight-bandwidth bound there.
    return pl.pallas_call(
        decoder_kernel,
        out_shape=jax.ShapeDtypeStruct((n_rows, v_pad), jnp.float32),
        grid=(v_pad // tile_v,),
        in_specs=[pl.BlockSpec((n_rows, d_model), lambda j: (0, 0)),  # resident
                  pl.BlockSpec((d_model, tile_v), lambda j: (0, j)),
                  pl.BlockSpec((1, tile_v), lambda j: (0, j))],
        out_specs=pl.BlockSpec((n_rows, tile_v), lambda j: (0, j)),
        compiler_params=pltpu.CompilerParams(
            dimension_semantics=("parallel",),
            vmem_limit_bytes=48 * 1024 * 1024),
    )(x2d, dec_w, dec_b)


# ---------------------------------------------------------------------------
# Parameter init (deterministic, synthetic; pre-transposed / pre-fused / padded)
# ---------------------------------------------------------------------------

def make_positional_encoding(max_len, d_model):
    position = jnp.arange(max_len, dtype=jnp.float32)[:, None]
    div_term = jnp.exp(jnp.arange(0, d_model, 2, dtype=jnp.float32)
                       * (-math.log(10000.0) / d_model))
    pe = jnp.zeros((max_len, 1, d_model), dtype=jnp.float32)
    pe = pe.at[:, 0, 0::2].set(jnp.sin(position * div_term))
    pe = pe.at[:, 0, 1::2].set(jnp.cos(position * div_term))
    return pe


def init_params(key, ntoken, d_model, nhead, d_hid, nlayers, max_len=64):
    D, H = d_model, nhead
    Dh = D // H
    Hp = _round_up(d_hid, 128)              # lane-dense FFN width (zero-padded)
    tile_v = min(512, _round_up(ntoken, 128))
    Vp = _round_up(ntoken, tile_v)          # lane-dense decoder width (zero-padded)
    initrange = 0.1

    keys = jax.random.split(key, 2 + nlayers)
    params = {
        "emb": jax.random.uniform(keys[0], (ntoken, D), jnp.float32,
                                  -initrange, initrange),
        "pe": make_positional_encoding(max_len, D),
    }

    dec_w = jax.random.uniform(keys[1], (ntoken, D), jnp.float32,
                               -initrange, initrange)
    params["dec_w"] = (jnp.zeros((D, Vp), jnp.float32)
                       .at[:, :ntoken].set(dec_w.T)).astype(jnp.bfloat16)
    params["dec_b"] = jnp.zeros((1, Vp), jnp.float32)

    names = ("wqkv", "bqkv", "wo", "bo", "w1", "b1", "w2", "b2",
             "ln1w", "ln1b", "ln2w", "ln2b")
    acc = {n: [] for n in names}
    inv_sqrt_dh = 1.0 / math.sqrt(Dh)
    for l in range(nlayers):
        kq, kk, kv, ko, k1, k2 = jax.random.split(keys[2 + l], 6)
        a_attn = math.sqrt(6.0 / (2 * D))
        a_ffn = math.sqrt(6.0 / (D + d_hid))
        # fold the 1/sqrt(d_head) attention scale into the Q columns (exact)
        wq = jax.random.uniform(kq, (D, D), jnp.float32, -a_attn, a_attn) * inv_sqrt_dh
        wk = jax.random.uniform(kk, (D, D), jnp.float32, -a_attn, a_attn)
        wv = jax.random.uniform(kv, (D, D), jnp.float32, -a_attn, a_attn)
        acc["wqkv"].append(jnp.concatenate([wq, wk, wv], axis=1))   # (D, 3D)
        acc["bqkv"].append(jnp.zeros((1, 3 * D), jnp.float32))      # zero bias (scaled trivially)
        acc["wo"].append(jax.random.uniform(ko, (D, D), jnp.float32, -a_attn, a_attn))
        acc["bo"].append(jnp.zeros((1, D), jnp.float32))
        w1 = jax.random.uniform(k1, (D, d_hid), jnp.float32, -a_ffn, a_ffn)
        acc["w1"].append(jnp.zeros((D, Hp), jnp.float32).at[:, :d_hid].set(w1))
        acc["b1"].append(jnp.zeros((1, Hp), jnp.float32))
        w2 = jax.random.uniform(k2, (d_hid, D), jnp.float32, -a_ffn, a_ffn)
        acc["w2"].append(jnp.zeros((Hp, D), jnp.float32).at[:d_hid, :].set(w2))
        acc["b2"].append(jnp.zeros((1, D), jnp.float32))
        acc["ln1w"].append(jnp.ones((1, D), jnp.float32))
        acc["ln1b"].append(jnp.zeros((1, D), jnp.float32))
        acc["ln2w"].append(jnp.ones((1, D), jnp.float32))
        acc["ln2b"].append(jnp.zeros((1, D), jnp.float32))

    weight_names = {"wqkv", "wo", "w1", "w2"}
    layers = {}
    for name, lst in acc.items():
        stacked = jnp.stack(lst, axis=0)
        layers[name] = stacked.astype(jnp.bfloat16) if name in weight_names else stacked
    params["layers"] = layers
    return params


# ---------------------------------------------------------------------------
# Forward pass
# ---------------------------------------------------------------------------

def transformer_forward(params, src, src_mask, *, d_model, nhead, ntoken):
    seq, batch = src.shape
    # Embedding gather + sqrt(d_model) scale + PE add: plain JAX (fuses with gather).
    x = params["emb"][src] * math.sqrt(d_model) + params["pe"][:seq]   # (S, B, D)
    # Batch-major 2D activation layout used by the kernels: row = b * seq + s.
    x2d = jnp.transpose(x, (1, 0, 2)).reshape(batch * seq, d_model)
    x2d = encoder_stack_call(x2d, src_mask, params["layers"],
                             nhead=nhead, batch=batch, seq=seq)        # (B*S, D)
    logits = decoder_call(x2d, params["dec_w"], params["dec_b"])       # (B*S, Vpad)
    logits = logits[:, :ntoken].reshape(batch, seq, ntoken)
    return jnp.transpose(logits, (1, 0, 2))                            # (S, B, ntoken)


# ---------------------------------------------------------------------------
# Main
# ---------------------------------------------------------------------------

if __name__ == "__main__":
    ntoken = 50
    d_model = 128      # lane-dense model width
    nhead = 2          # module constant
    d_hid = 200        # module constant (zero-padded to 256 internally)
    nlayers = 2        # module constant
    S, B = 16, 2

    key = jax.random.PRNGKey(0)
    k_params, k_src = jax.random.split(key)

    params = init_params(k_params, ntoken, d_model, nhead, d_hid, nlayers, max_len=64)
    src = jax.random.randint(k_src, (S, B), 0, ntoken, dtype=jnp.int32)

    # Causal additive mask (PyTorch tutorial uses -inf; large negative is equivalent).
    src_mask = jnp.where(jnp.triu(jnp.ones((S, S), dtype=bool), k=1),
                         -1e9, 0.0).astype(jnp.float32)

    fwd = jax.jit(functools.partial(transformer_forward,
                                    d_model=d_model, nhead=nhead, ntoken=ntoken))
    out = fwd(params, src, src_mask)
    out = jax.block_until_ready(out)

    assert out.shape == (S, B, ntoken), out.shape
    assert bool(jnp.all(jnp.isfinite(out)))
    print("KERNEL_OK")
</pallas_src>

<mosaic_0001>
module attributes {stable_mosaic.version = 11 : i64} {
  func.func @decoder_kernel(%arg0: i32, %arg1: memref<32x128xf32, #tpu.memory_space<vmem>>, %arg2: memref<128x128xbf16, #tpu.memory_space<vmem>>, %arg3: memref<1x128xf32, #tpu.memory_space<vmem>>, %arg4: memref<32x128xf32, #tpu.memory_space<vmem>>) attributes {dimension_semantics = [#tpu.dimension_semantics<parallel>], iteration_bounds = array<i64: 1>, scalar_prefetch = 0 : i64, scratch_operands = 0 : i64, tpu.core_type = #tpu.core_type<tc>, window_params = [{pipeline_mode = #tpu.pipeline_mode<synchronous>, transform_indices = @transform_0, window_bounds = array<i64: 32, 128>}, {transform_indices = @transform_1, window_bounds = array<i64: 128, 128>}, {transform_indices = @transform_2, window_bounds = array<i64: 1, 128>}, {transform_indices = @transform_3, window_bounds = array<i64: 32, 128>}]} {
    %c0 = arith.constant 0 : index
    %c0_0 = arith.constant 0 : index
    %0 = vector.load %arg1[%c0, %c0_0] : memref<32x128xf32, #tpu.memory_space<vmem>>, vector<32x128xf32>
    %1 = arith.truncf %0 : vector<32x128xf32> to vector<32x128xbf16>
    %c0_1 = arith.constant 0 : index
    %c0_2 = arith.constant 0 : index
    %2 = vector.load %arg2[%c0_1, %c0_2] : memref<128x128xbf16, #tpu.memory_space<vmem>>, vector<128x128xbf16>
    %cst = arith.constant dense<0.000000e+00> : vector<32x128xf32>
    %3 = tpu.matmul %1, %2, %cst {dimension_numbers = #tpu.dot_dimension_numbers<[1], [0], [0], [1], [0, 0, 1, 1], [], []>} : vector<32x128xbf16>, vector<128x128xbf16>, vector<32x128xf32> -> vector<32x128xf32>
    %c0_3 = arith.constant 0 : index
    %c0_4 = arith.constant 0 : index
    %4 = vector.load %arg3[%c0_3, %c0_4] : memref<1x128xf32, #tpu.memory_space<vmem>>, vector<1x128xf32>
    %5 = vector.broadcast %4 : vector<1x128xf32> to vector<32x128xf32>
    %6 = arith.addf %3, %5 : vector<32x128xf32>
    %c0_5 = arith.constant 0 : index
    %c0_6 = arith.constant 0 : index
    %7 = vector.load %arg4[%c0_5, %c0_6] : memref<32x128xf32, #tpu.memory_space<vmem>>, vector<32x128xf32>
    tpu.vector_store %arg4[%c0_5, %c0_6], %6 {strides = array<i32>} : memref<32x128xf32, #tpu.memory_space<vmem>>, vector<32x128xf32>,
    return
  }
  func.func @transform_0(%arg0: i32) -> (i32, i32) {
    %c0_i32 = arith.constant 0 : i32
    %c0_i32_0 = arith.constant 0 : i32
    %c0_i32_1 = arith.constant 0 : i32
    return %c0_i32, %c0_i32_0 : i32, i32
  }
  func.func @transform_1(%arg0: i32) -> (i32, i32) {
    %c0_i32 = arith.constant 0 : i32
    %c0_i32_0 = arith.constant 0 : i32
    return %c0_i32, %arg0 : i32, i32
  }
  func.func @transform_2(%arg0: i32) -> (i32, i32) {
    %c0_i32 = arith.constant 0 : i32
    %c0_i32_0 = arith.constant 0 : i32
    return %c0_i32, %arg0 : i32, i32
  }
  func.func @transform_3(%arg0: i32) -> (i32, i32) {
    %c0_i32 = arith.constant 0 : i32
    %c0_i32_0 = arith.constant 0 : i32
    return %c0_i32, %arg0 : i32, i32
  }
}

module attributes {stable_mosaic.version = 11 : i64} {
  func.func @encoder_stack_kernel(%arg0: i32, %arg1: i32, %arg2: memref<32x128xf32, #tpu.memory_space<vmem>>, %arg3: memref<16x16xf32, #tpu.memory_space<vmem>>, %arg4: memref<1x128x384xbf16, #tpu.memory_space<vmem>>, %arg5: memref<1x1x384xf32, #tpu.memory_space<vmem>>, %arg6: memref<1x128x128xbf16, #tpu.memory_space<vmem>>, %arg7: memref<1x1x128xf32, #tpu.memory_space<vmem>>, %arg8: memref<1x128x256xbf16, #tpu.memory_space<vmem>>, %arg9: memref<1x1x256xf32, #tpu.memory_space<vmem>>, %arg10: memref<1x256x128xbf16, #tpu.memory_space<vmem>>, %arg11: memref<1x1x128xf32, #tpu.memory_space<vmem>>, %arg12: memref<1x1x128xf32, #tpu.memory_space<vmem>>, %arg13: memref<1x1x128xf32, #tpu.memory_space<vmem>>, %arg14: memref<1x1x128xf32, #tpu.memory_space<vmem>>, %arg15: memref<1x1x128xf32, #tpu.memory_space<vmem>>, %arg16: memref<32x128xf32, #tpu.memory_space<vmem>>) attributes {dimension_semantics = [#tpu.dimension_semantics<parallel>, #tpu.dimension_semantics<arbitrary>], iteration_bounds = array<i64: 1, 2>, scalar_prefetch = 0 : i64, scratch_operands = 0 : i64, tpu.core_type = #tpu.core_type<tc>, window_params = [{transform_indices = @transform_0, window_bounds = array<i64: 32, 128>}, {pipeline_mode = #tpu.pipeline_mode<synchronous>, transform_indices = @transform_1, window_bounds = array<i64: 16, 16>}, {transform_indices = @transform_2, window_bounds = array<i64: 1, 128, 384>}, {transform_indices = @transform_3, window_bounds = array<i64: 1, 1, 384>}, {transform_indices = @transform_4, window_bounds = array<i64: 1, 128, 128>}, {transform_indices = @transform_5, window_bounds = array<i64: 1, 1, 128>}, {transform_indices = @transform_6, window_bounds = array<i64: 1, 128, 256>}, {transform_indices = @transform_7, window_bounds = array<i64: 1, 1, 256>}, {transform_indices = @transform_8, window_bounds = array<i64: 1, 256, 128>}, {transform_indices = @transform_9, window_bounds = array<i64: 1, 1, 128>}, {transform_indices = @transform_10, window_bounds = array<i64: 1, 1, 128>}, {transform_indices = @transform_11, window_bounds = array<i64: 1, 1, 128>}, {transform_indices = @transform_12, window_bounds = array<i64: 1, 1, 128>}, {transform_indices = @transform_13, window_bounds = array<i64: 1, 1, 128>}, {transform_indices = @transform_14, window_bounds = array<i64: 32, 128>}]} {
    %c0_i32 = arith.constant 0 : i32
    %0 = arith.cmpi eq, %arg1, %c0_i32 : i32
    %1 = arith.extui %0 : i1 to i32
    %c0_i32_0 = arith.constant 0 : i32
    %2 = arith.cmpi ne, %1, %c0_i32_0 : i32
    scf.if %2 {
      %c0_64 = arith.constant 0 : index
      %c0_65 = arith.constant 0 : index
      %143 = vector.load %arg2[%c0_64, %c0_65] : memref<32x128xf32, #tpu.memory_space<vmem>>, vector<32x128xf32>
      %c0_66 = arith.constant 0 : index
      %c0_67 = arith.constant 0 : index
      %144 = vector.load %arg16[%c0_66, %c0_67] : memref<32x128xf32, #tpu.memory_space<vmem>>, vector<32x128xf32>
      tpu.vector_store %arg16[%c0_66, %c0_67], %143 {strides = array<i32>} : memref<32x128xf32, #tpu.memory_space<vmem>>, vector<32x128xf32>,
    } else {
    }
    %c0 = arith.constant 0 : index
    %c0_1 = arith.constant 0 : index
    %3 = vector.load %arg16[%c0, %c0_1] : memref<32x128xf32, #tpu.memory_space<vmem>>, vector<32x128xf32>
    %4 = arith.truncf %3 : vector<32x128xf32> to vector<32x128xbf16>
    %c0_2 = arith.constant 0 : index
    %c0_3 = arith.constant 0 : index
    %c0_4 = arith.constant 0 : index
    %5 = vector.load %arg4[%c0_2, %c0_3, %c0_4] : memref<1x128x384xbf16, #tpu.memory_space<vmem>>, vector<1x128x384xbf16>
    %6 = vector.shape_cast %5 : vector<1x128x384xbf16> to vector<128x384xbf16>
    %cst = arith.constant dense<0.000000e+00> : vector<32x384xf32>
    %7 = tpu.matmul %4, %6, %cst {dimension_numbers = #tpu.dot_dimension_numbers<[1], [0], [0], [1], [0, 0, 1, 1], [], []>} : vector<32x128xbf16>, vector<128x384xbf16>, vector<32x384xf32> -> vector<32x384xf32>
    %c0_5 = arith.constant 0 : index
    %c0_6 = arith.constant 0 : index
    %c0_7 = arith.constant 0 : index
    %8 = vector.load %arg5[%c0_5, %c0_6, %c0_7] : memref<1x1x384xf32, #tpu.memory_space<vmem>>, vector<1x1x384xf32>
    %9 = vector.shape_cast %8 : vector<1x1x384xf32> to vector<1x384xf32>
    %10 = vector.broadcast %9 : vector<1x384xf32> to vector<32x384xf32>
    %11 = arith.addf %7, %10 : vector<32x384xf32>
    %12 = vector.extract_strided_slice %11 {offsets = [0, 0], sizes = [32, 128], strides = [1, 1]} : vector<32x384xf32> to vector<32x128xf32>
    %13 = vector.shape_cast %12 : vector<32x128xf32> to vector<2x16x128xf32>
    %14 = arith.truncf %13 : vector<2x16x128xf32> to vector<2x16x128xbf16>
    %15 = vector.extract_strided_slice %11 {offsets = [0, 128], sizes = [32, 128], strides = [1, 1]} : vector<32x384xf32> to vector<32x128xf32>
    %16 = vector.shape_cast %15 : vector<32x128xf32> to vector<2x16x128xf32>
    %17 = arith.truncf %16 : vector<2x16x128xf32> to vector<2x16x128xbf16>
    %18 = vector.extract_strided_slice %11 {offsets = [0, 256], sizes = [32, 128], strides = [1, 1]} : vector<32x384xf32> to vector<32x128xf32>
    %19 = vector.shape_cast %18 : vector<32x128xf32> to vector<2x16x128xf32>
    %20 = arith.truncf %19 : vector<2x16x128xf32> to vector<2x16x128xbf16>
    %c0_8 = arith.constant 0 : index
    %c0_9 = arith.constant 0 : index
    %21 = vector.load %arg3[%c0_8, %c0_9] : memref<16x16xf32, #tpu.memory_space<vmem>>, vector<16x16xf32>
    %22 = vector.shape_cast %21 : vector<16x16xf32> to vector<1x16x16xf32>
    %23 = vector.shape_cast %22 : vector<1x16x16xf32> to vector<1x16x16xf32>
    %24 = vector.broadcast %23 : vector<1x16x16xf32> to vector<2x16x16xf32>
    %25 = vector.extract_strided_slice %14 {offsets = [0, 0, 0], sizes = [2, 16, 64], strides = [1, 1, 1]} : vector<2x16x128xbf16> to vector<2x16x64xbf16>
    %26 = vector.extract_strided_slice %17 {offsets = [0, 0, 0], sizes = [2, 16, 64], strides = [1, 1, 1]} : vector<2x16x128xbf16> to vector<2x16x64xbf16>
    %27 = vector.extract_strided_slice %20 {offsets = [0, 0, 0], sizes = [2, 16, 64], strides = [1, 1, 1]} : vector<2x16x128xbf16> to vector<2x16x64xbf16>
    "tpu.trace_start"() <{level = 10 : i32, message = "bqd,bkd->bqk"}> : () -> ()
    %cst_10 = arith.constant dense<0.000000e+00> : vector<2x16x16xf32>
    %28 = tpu.matmul %25, %26, %cst_10 {dimension_numbers = #tpu.dot_dimension_numbers<[2], [2], [1], [1], [0, 0, 0, 1, 1, 1], [0], [0]>} : vector<2x16x64xbf16>, vector<2x16x64xbf16>, vector<2x16x16xf32> -> vector<2x16x16xf32>
    "tpu.trace_stop"() : () -> ()
    %29 = arith.addf %28, %24 : vector<2x16x16xf32>
    %cst_11 = arith.constant dense<0xFF800000> : vector<2x16xf32>
    %30 = vector.multi_reduction <maximumf>, %29, %cst_11 [2] : vector<2x16x16xf32> to vector<2x16xf32>
    %31 = vector.shape_cast %30 : vector<2x16xf32> to vector<2x16x1xf32>
    %32 = vector.broadcast %31 : vector<2x16x1xf32> to vector<2x16x16xf32>
    %33 = arith.subf %29, %32 : vector<2x16x16xf32>
    %34 = math.exp %33 : vector<2x16x16xf32>
    %cst_12 = arith.constant dense<0.000000e+00> : vector<2x16xf32>
    %35 = vector.multi_reduction <add>, %34, %cst_12 [2] : vector<2x16x16xf32> to vector<2x16xf32>
    %36 = vector.shape_cast %35 : vector<2x16xf32> to vector<2x16x1xf32>
    %37 = tpu.reciprocal %36 {approx = true} : vector<2x16x1xf32> -> vector<2x16x1xf32>
    %38 = vector.broadcast %37 : vector<2x16x1xf32> to vector<2x16x16xf32>
    %39 = arith.mulf %34, %38 : vector<2x16x16xf32>
    %40 = arith.truncf %39 : vector<2x16x16xf32> to vector<2x16x16xbf16>
    "tpu.trace_start"() <{level = 10 : i32, message = "bqk,bkd->bqd"}> : () -> ()
    %cst_13 = arith.constant dense<0.000000e+00> : vector<2x16x64xf32>
    %41 = tpu.matmul %40, %27, %cst_13 {dimension_numbers = #tpu.dot_dimension_numbers<[2], [1], [1], [2], [0, 0, 0, 1, 1, 2], [0], [0]>} : vector<2x16x16xbf16>, vector<2x16x64xbf16>, vector<2x16x64xf32> -> vector<2x16x64xf32>
    "tpu.trace_stop"() : () -> ()
    %42 = vector.shape_cast %41 : vector<2x16x64xf32> to vector<32x64xf32>
    %43 = vector.extract_strided_slice %14 {offsets = [0, 0, 64], sizes = [2, 16, 64], strides = [1, 1, 1]} : vector<2x16x128xbf16> to vector<2x16x64xbf16>
    %44 = vector.extract_strided_slice %17 {offsets = [0, 0, 64], sizes = [2, 16, 64], strides = [1, 1, 1]} : vector<2x16x128xbf16> to vector<2x16x64xbf16>
    %45 = vector.extract_strided_slice %20 {offsets = [0, 0, 64], sizes = [2, 16, 64], strides = [1, 1, 1]} : vector<2x16x128xbf16> to vector<2x16x64xbf16>
    "tpu.trace_start"() <{level = 10 : i32, message = "bqd,bkd->bqk"}> : () -> ()
    %cst_14 = arith.constant dense<0.000000e+00> : vector<2x16x16xf32>
    %46 = tpu.matmul %43, %44, %cst_14 {dimension_numbers = #tpu.dot_dimension_numbers<[2], [2], [1], [1], [0, 0, 0, 1, 1, 1], [0], [0]>} : vector<2x16x64xbf16>, vector<2x16x64xbf16>, vector<2x16x16xf32> -> vector<2x16x16xf32>
    "tpu.trace_stop"() : () -> ()
    %47 = arith.addf %46, %24 : vector<2x16x16xf32>
    %cst_15 = arith.constant dense<0xFF800000> : vector<2x16xf32>
    %48 = vector.multi_reduction <maximumf>, %47, %cst_15 [2] : vector<2x16x16xf32> to vector<2x16xf32>
    %49 = vector.shape_cast %48 : vector<2x16xf32> to vector<2x16x1xf32>
    %50 = vector.broadcast %49 : vector<2x16x1xf32> to vector<2x16x16xf32>
    %51 = arith.subf %47, %50 : vector<2x16x16xf32>
    %52 = math.exp %51 : vector<2x16x16xf32>
    %cst_16 = arith.constant dense<0.000000e+00> : vector<2x16xf32>
    %53 = vector.multi_reduction <add>, %52, %cst_16 [2] : vector<2x16x16xf32> to vector<2x16xf32>
    %54 = vector.shape_cast %53 : vector<2x16xf32> to vector<2x16x1xf32>
    %55 = tpu.reciprocal %54 {approx = true} : vector<2x16x1xf32> -> vector<2x16x1xf32>
    %56 = vector.broadcast %55 : vector<2x16x1xf32> to vector<2x16x16xf32>
    %57 = arith.mulf %52, %56 : vector<2x16x16xf32>
    %58 = arith.truncf %57 : vector<2x16x16xf32> to vector<2x16x16xbf16>
    "tpu.trace_start"() <{level = 10 : i32, message = "bqk,bkd->bqd"}> : () -> ()
    %cst_17 = arith.constant dense<0.000000e+00> : vector<2x16x64xf32>
    %59 = tpu.matmul %58, %45, %cst_17 {dimension_numbers = #tpu.dot_dimension_numbers<[2], [1], [1], [2], [0, 0, 0, 1, 1, 2], [0], [0]>} : vector<2x16x16xbf16>, vector<2x16x64xbf16>, vector<2x16x64xf32> -> vector<2x16x64xf32>
    "tpu.trace_stop"() : () -> ()
    %60 = vector.shape_cast %59 : vector<2x16x64xf32> to vector<32x64xf32>
    %61 = tpu.concatenate %42, %60 in 1 : vector<32x64xf32>, vector<32x64xf32> -> vector<32x128xf32>
    %62 = arith.truncf %61 : vector<32x128xf32> to vector<32x128xbf16>
    %c0_18 = arith.constant 0 : index
    %c0_19 = arith.constant 0 : index
    %c0_20 = arith.constant 0 : index
    %63 = vector.load %arg6[%c0_18, %c0_19, %c0_20] : memref<1x128x128xbf16, #tpu.memory_space<vmem>>, vector<1x128x128xbf16>
    %64 = vector.shape_cast %63 : vector<1x128x128xbf16> to vector<128x128xbf16>
    %cst_21 = arith.constant dense<0.000000e+00> : vector<32x128xf32>
    %65 = tpu.matmul %62, %64, %cst_21 {dimension_numbers = #tpu.dot_dimension_numbers<[1], [0], [0], [1], [0, 0, 1, 1], [], []>} : vector<32x128xbf16>, vector<128x128xbf16>, vector<32x128xf32> -> vector<32x128xf32>
    %c0_22 = arith.constant 0 : index
    %c0_23 = arith.constant 0 : index
    %c0_24 = arith.constant 0 : index
    %66 = vector.load %arg7[%c0_22, %c0_23, %c0_24] : memref<1x1x128xf32, #tpu.memory_space<vmem>>, vector<1x1x128xf32>
    %67 = vector.shape_cast %66 : vector<1x1x128xf32> to vector<1x128xf32>
    %68 = vector.broadcast %67 : vector<1x128xf32> to vector<32x128xf32>
    %69 = arith.addf %65, %68 : vector<32x128xf32>
    %70 = arith.addf %3, %69 : vector<32x128xf32>
    %c0_25 = arith.constant 0 : index
    %c0_26 = arith.constant 0 : index
    %c0_27 = arith.constant 0 : index
    %71 = vector.load %arg12[%c0_25, %c0_26, %c0_27] : memref<1x1x128xf32, #tpu.memory_space<vmem>>, vector<1x1x128xf32>
    %72 = vector.shape_cast %71 : vector<1x1x128xf32> to vector<1x128xf32>
    %c0_28 = arith.constant 0 : index
    %c0_29 = arith.constant 0 : index
    %c0_30 = arith.constant 0 : index
    %73 = vector.load %arg13[%c0_28, %c0_29, %c0_30] : memref<1x1x128xf32, #tpu.memory_space<vmem>>, vector<1x1x128xf32>
    %74 = vector.shape_cast %73 : vector<1x1x128xf32> to vector<1x128xf32>
    %cst_31 = arith.constant dense<0.000000e+00> : vector<32xf32>
    %75 = vector.multi_reduction <add>, %70, %cst_31 [1] : vector<32x128xf32> to vector<32xf32>
    %76 = vector.shape_cast %75 : vector<32xf32> to vector<32x1xf32>
    %cst_32 = arith.constant 1.280000e+02 : f32
    %77 = vector.broadcast %cst_32 : f32 to vector<32x1xf32>
    %78 = arith.divf %76, %77 : vector<32x1xf32>
    %79 = vector.broadcast %78 : vector<32x1xf32> to vector<32x128xf32>
    %80 = arith.subf %70, %79 : vector<32x128xf32>
    %81 = arith.mulf %80, %80 : vector<32x128xf32>
    %cst_33 = arith.constant dense<0.000000e+00> : vector<32xf32>
    %82 = vector.multi_reduction <add>, %81, %cst_33 [1] : vector<32x128xf32> to vector<32xf32>
    %83 = vector.shape_cast %82 : vector<32xf32> to vector<32x1xf32>
    %cst_34 = arith.constant 1.280000e+02 : f32
    %84 = vector.broadcast %cst_34 : f32 to vector<32x1xf32>
    %85 = arith.divf %83, %84 : vector<32x1xf32>
    %86 = vector.broadcast %78 : vector<32x1xf32> to vector<32x128xf32>
    %87 = arith.subf %70, %86 : vector<32x128xf32>
    %cst_35 = arith.constant 9.99999974E-6 : f32
    %88 = vector.broadcast %cst_35 : f32 to vector<32x1xf32>
    %89 = arith.addf %85, %88 : vector<32x1xf32>
    %90 = math.rsqrt %89 : vector<32x1xf32>
    %91 = vector.broadcast %90 : vector<32x1xf32> to vector<32x128xf32>
    %92 = arith.mulf %87, %91 : vector<32x128xf32>
    %93 = vector.broadcast %72 : vector<1x128xf32> to vector<32x128xf32>
    %94 = arith.mulf %92, %93 : vector<32x128xf32>
    %95 = vector.broadcast %74 : vector<1x128xf32> to vector<32x128xf32>
    %96 = arith.addf %94, %95 : vector<32x128xf32>
    %97 = arith.truncf %96 : vector<32x128xf32> to vector<32x128xbf16>
    %c0_36 = arith.constant 0 : index
    %c0_37 = arith.constant 0 : index
    %c0_38 = arith.constant 0 : index
    %98 = vector.load %arg8[%c0_36, %c0_37, %c0_38] : memref<1x128x256xbf16, #tpu.memory_space<vmem>>, vector<1x128x256xbf16>
    %99 = vector.shape_cast %98 : vector<1x128x256xbf16> to vector<128x256xbf16>
    %cst_39 = arith.constant dense<0.000000e+00> : vector<32x256xf32>
    %100 = tpu.matmul %97, %99, %cst_39 {dimension_numbers = #tpu.dot_dimension_numbers<[1], [0], [0], [1], [0, 0, 1, 1], [], []>} : vector<32x128xbf16>, vector<128x256xbf16>, vector<32x256xf32> -> vector<32x256xf32>
    %c0_40 = arith.constant 0 : index
    %c0_41 = arith.constant 0 : index
    %c0_42 = arith.constant 0 : index
    %101 = vector.load %arg9[%c0_40, %c0_41, %c0_42] : memref<1x1x256xf32, #tpu.memory_space<vmem>>, vector<1x1x256xf32>
    %102 = vector.shape_cast %101 : vector<1x1x256xf32> to vector<1x256xf32>
    %103 = vector.broadcast %102 : vector<1x256xf32> to vector<32x256xf32>
    %104 = arith.addf %100, %103 : vector<32x256xf32>
    %cst_43 = arith.constant 0.000000e+00 : f32
    %105 = vector.broadcast %cst_43 : f32 to vector<32x256xf32>
    %106 = arith.maximumf %104, %105 : vector<32x256xf32>
    %107 = arith.truncf %106 : vector<32x256xf32> to vector<32x256xbf16>
    %c0_44 = arith.constant 0 : index
    %c0_45 = arith.constant 0 : index
    %c0_46 = arith.constant 0 : index
    %108 = vector.load %arg10[%c0_44, %c0_45, %c0_46] : memref<1x256x128xbf16, #tpu.memory_space<vmem>>, vector<1x256x128xbf16>
    %109 = vector.shape_cast %108 : vector<1x256x128xbf16> to vector<256x128xbf16>
    %cst_47 = arith.constant dense<0.000000e+00> : vector<32x128xf32>
    %110 = tpu.matmul %107, %109, %cst_47 {dimension_numbers = #tpu.dot_dimension_numbers<[1], [0], [0], [1], [0, 0, 1, 1], [], []>} : vector<32x256xbf16>, vector<256x128xbf16>, vector<32x128xf32> -> vector<32x128xf32>
    %c0_48 = arith.constant 0 : index
    %c0_49 = arith.constant 0 : index
    %c0_50 = arith.constant 0 : index
    %111 = vector.load %arg11[%c0_48, %c0_49, %c0_50] : memref<1x1x128xf32, #tpu.memory_space<vmem>>, vector<1x1x128xf32>
    %112 = vector.shape_cast %111 : vector<1x1x128xf32> to vector<1x128xf32>
    %113 = vector.broadcast %112 : vector<1x128xf32> to vector<32x128xf32>
    %114 = arith.addf %110, %113 : vector<32x128xf32>
    %115 = arith.addf %96, %114 : vector<32x128xf32>
    %c0_51 = arith.constant 0 : index
    %c0_52 = arith.constant 0 : index
    %c0_53 = arith.constant 0 : index
    %116 = vector.load %arg14[%c0_51, %c0_52, %c0_53] : memref<1x1x128xf32, #tpu.memory_space<vmem>>, vector<1x1x128xf32>
    %117 = vector.shape_cast %116 : vector<1x1x128xf32> to vector<1x128xf32>
    %c0_54 = arith.constant 0 : index
    %c0_55 = arith.constant 0 : index
    %c0_56 = arith.constant 0 : index
    %118 = vector.load %arg15[%c0_54, %c0_55, %c0_56] : memref<1x1x128xf32, #tpu.memory_space<vmem>>, vector<1x1x128xf32>
    %119 = vector.shape_cast %118 : vector<1x1x128xf32> to vector<1x128xf32>
    %cst_57 = arith.constant dense<0.000000e+00> : vector<32xf32>
    %120 = vector.multi_reduction <add>, %115, %cst_57 [1] : vector<32x128xf32> to vector<32xf32>
    %121 = vector.shape_cast %120 : vector<32xf32> to vector<32x1xf32>
    %cst_58 = arith.constant 1.280000e+02 : f32
    %122 = vector.broadcast %cst_58 : f32 to vector<32x1xf32>
    %123 = arith.divf %121, %122 : vector<32x1xf32>
    %124 = vector.broadcast %123 : vector<32x1xf32> to vector<32x128xf32>
    %125 = arith.subf %115, %124 : vector<32x128xf32>
    %126 = arith.mulf %125, %125 : vector<32x128xf32>
    %cst_59 = arith.constant dense<0.000000e+00> : vector<32xf32>
    %127 = vector.multi_reduction <add>, %126, %cst_59 [1] : vector<32x128xf32> to vector<32xf32>
    %128 = vector.shape_cast %127 : vector<32xf32> to vector<32x1xf32>
    %cst_60 = arith.constant 1.280000e+02 : f32
    %129 = vector.broadcast %cst_60 : f32 to vector<32x1xf32>
    %130 = arith.divf %128, %129 : vector<32x1xf32>
    %131 = vector.broadcast %123 : vector<32x1xf32> to vector<32x128xf32>
    %132 = arith.subf %115, %131 : vector<32x128xf32>
    %cst_61 = arith.constant 9.99999974E-6 : f32
    %133 = vector.broadcast %cst_61 : f32 to vector<32x1xf32>
    %134 = arith.addf %130, %133 : vector<32x1xf32>
    %135 = math.rsqrt %134 : vector<32x1xf32>
    %136 = vector.broadcast %135 : vector<32x1xf32> to vector<32x128xf32>
    %137 = arith.mulf %132, %136 : vector<32x128xf32>
    %138 = vector.broadcast %117 : vector<1x128xf32> to vector<32x128xf32>
    %139 = arith.mulf %137, %138 : vector<32x128xf32>
    %140 = vector.broadcast %119 : vector<1x128xf32> to vector<32x128xf32>
    %141 = arith.addf %139, %140 : vector<32x128xf32>
    %c0_62 = arith.constant 0 : index
    %c0_63 = arith.constant 0 : index
    %142 = vector.load %arg16[%c0_62, %c0_63] : memref<32x128xf32, #tpu.memory_space<vmem>>, vector<32x128xf32>
    tpu.vector_store %arg16[%c0_62, %c0_63], %141 {strides = array<i32>} : memref<32x128xf32, #tpu.memory_space<vmem>>, vector<32x128xf32>,
    return
  }
  func.func @transform_0(%arg0: i32, %arg1: i32) -> (i32, i32) {
    %c0_i32 = arith.constant 0 : i32
    %c0_i32_0 = arith.constant 0 : i32
    return %arg0, %c0_i32 : i32, i32
  }
  func.func @transform_1(%arg0: i32, %arg1: i32) -> (i32, i32) {
    %c0_i32 = arith.constant 0 : i32
    %c0_i32_0 = arith.constant 0 : i32
    %c0_i32_1 = arith.constant 0 : i32
    return %c0_i32, %c0_i32_0 : i32, i32
  }
  func.func @transform_2(%arg0: i32, %arg1: i32) -> (i32, i32, i32) {
    %c0_i32 = arith.constant 0 : i32
    %c0_i32_0 = arith.constant 0 : i32
    %c0_i32_1 = arith.constant 0 : i32
    return %arg1, %c0_i32, %c0_i32_0 : i32, i32, i32
  }
  func.func @transform_3(%arg0: i32, %arg1: i32) -> (i32, i32, i32) {
    %c0_i32 = arith.constant 0 : i32
    %c0_i32_0 = arith.constant 0 : i32
    %c0_i32_1 = arith.constant 0 : i32
    return %arg1, %c0_i32, %c0_i32_0 : i32, i32, i32
  }
  func.func @transform_4(%arg0: i32, %arg1: i32) -> (i32, i32, i32) {
    %c0_i32 = arith.constant 0 : i32
    %c0_i32_0 = arith.constant 0 : i32
    %c0_i32_1 = arith.constant 0 : i32
    return %arg1, %c0_i32, %c0_i32_0 : i32, i32, i32
  }
  func.func @transform_5(%arg0: i32, %arg1: i32) -> (i32, i32, i32) {
    %c0_i32 = arith.constant 0 : i32
    %c0_i32_0 = arith.constant 0 : i32
    %c0_i32_1 = arith.constant 0 : i32
    return %arg1, %c0_i32, %c0_i32_0 : i32, i32, i32
  }
  func.func @transform_6(%arg0: i32, %arg1: i32) -> (i32, i32, i32) {
    %c0_i32 = arith.constant 0 : i32
    %c0_i32_0 = arith.constant 0 : i32
    %c0_i32_1 = arith.constant 0 : i32
    return %arg1, %c0_i32, %c0_i32_0 : i32, i32, i32
  }
  func.func @transform_7(%arg0: i32, %arg1: i32) -> (i32, i32, i32) {
    %c0_i32 = arith.constant 0 : i32
    %c0_i32_0 = arith.constant 0 : i32
    %c0_i32_1 = arith.constant 0 : i32
    return %arg1, %c0_i32, %c0_i32_0 : i32, i32, i32
  }
  func.func @transform_8(%arg0: i32, %arg1: i32) -> (i32, i32, i32) {
    %c0_i32 = arith.constant 0 : i32
    %c0_i32_0 = arith.constant 0 : i32
    %c0_i32_1 = arith.constant 0 : i32
    return %arg1, %c0_i32, %c0_i32_0 : i32, i32, i32
  }
  func.func @transform_9(%arg0: i32, %arg1: i32) -> (i32, i32, i32) {
    %c0_i32 = arith.constant 0 : i32
    %c0_i32_0 = arith.constant 0 : i32
    %c0_i32_1 = arith.constant 0 : i32
    return %arg1, %c0_i32, %c0_i32_0 : i32, i32, i32
  }
  func.func @transform_10(%arg0: i32, %arg1: i32) -> (i32, i32, i32) {
    %c0_i32 = arith.constant 0 : i32
    %c0_i32_0 = arith.constant 0 : i32
    %c0_i32_1 = arith.constant 0 : i32
    return %arg1, %c0_i32, %c0_i32_0 : i32, i32, i32
  }
  func.func @transform_11(%arg0: i32, %arg1: i32) -> (i32, i32, i32) {
    %c0_i32 = arith.constant 0 : i32
    %c0_i32_0 = arith.constant 0 : i32
    %c0_i32_1 = arith.constant 0 : i32
    return %arg1, %c0_i32, %c0_i32_0 : i32, i32, i32
  }
  func.func @transform_12(%arg0: i32, %arg1: i32) -> (i32, i32, i32) {
    %c0_i32 = arith.constant 0 : i32
    %c0_i32_0 = arith.constant 0 : i32
    %c0_i32_1 = arith.constant 0 : i32
    return %arg1, %c0_i32, %c0_i32_0 : i32, i32, i32
  }
  func.func @transform_13(%arg0: i32, %arg1: i32) -> (i32, i32, i32) {
    %c0_i32 = arith.constant 0 : i32
    %c0_i32_0 = arith.constant 0 : i32
    %c0_i32_1 = arith.constant 0 : i32
    return %arg1, %c0_i32, %c0_i32_0 : i32, i32, i32
  }
  func.func @transform_14(%arg0: i32, %arg1: i32) -> (i32, i32) {
    %c0_i32 = arith.constant 0 : i32
    %c0_i32_0 = arith.constant 0 : i32
    return %arg0, %c0_i32 : i32, i32
  }
}

</mosaic_0001>

<llo_original>
// kernel: transformer_forward.3
$region0: #{transformer_forward.3}
  #allocation0 [shape = 'u32[]', space=smem, size = 0x4, offset = 0x4, fixed_abs, tag = 'smem constant byte address 0x4 - core index']
  #allocation1 [shape = 'u32[144,128]{1,0:T(1,128)}', space=vmem, size = 0x12000, scoped, tag = 'internal scratch']
  %s0 = inlined_call_operand.vmem [shape: f32[32,128], index: 0, kind: input, shape index: {}]
  %s1 = inlined_call_operand.vmem [shape: bf16[128,128], index: 1, kind: input, shape index: {}]
  %s2 = inlined_call_operand.vmem [shape: f32[1,128], index: 2, kind: input, shape index: {}]
  %s3 = inlined_call_operand.vmem [shape: f32[32,128], index: 3, kind: output, shape index: {}]
  %s4 = sld [smem:[#allocation0]]
  $region22: #{transformer_forward.3} parent=0
    _
  %s6 = ssub.s32 1, %s4
  %s7 = scalar_select 0, %s6, %s4
  // Predicated region
  $region2: #{transformer_forward.3} parent=0 // pred_check
    _
  $region3: #{transformer_forward.3} parent=0 // pred_check_branch
    %9 = sbr.rel (0) target = $region5
  $region4: #{transformer_forward.3} parent=0 // pred_region
    _
  $region5: #{transformer_forward.3} parent=0 // pred_fallthru
    _
  // Predicated region
  $region6: #{transformer_forward.3} parent=0 // pred_check
    _
  $region7: #{transformer_forward.3} parent=0 // pred_check_branch
    %11 = sbr.rel (0) target = $region9
  $region8: #{transformer_forward.3} parent=0 // pred_region
    _
  $region9: #{transformer_forward.3} parent=0 // pred_fallthru
    _
  // Predicated region
  $region10: #{transformer_forward.3} parent=0 // pred_check
    _
  $region11: #{transformer_forward.3} parent=0 // pred_check_branch
    %13 = sbr.rel (0) target = $region13
  $region12: #{transformer_forward.3} parent=0 // pred_region
    _
  $region13: #{transformer_forward.3} parent=0 // pred_fallthru
    _
  %v15 = vld [vmem:[%s0] sm:$0xff]
  %v16 = vld [vmem:[%s0 + $0x8] sm:$0xff]
  %v17 = vld [vmem:[%s0 + $0x10] sm:$0xff]
  %v18 = vld [vmem:[%s0 + $0x18] sm:$0xff]
  %v19 = vpack.c.bf16 %v16, %v15
  %v20 = vpack.c.bf16 %v18, %v17
  %v21 = vld [vmem:[%s1] sm:$0xf]
  %v22 = vld [vmem:[%s1 + $0x4] sm:$0xf]
  %v23 = vld [vmem:[%s1 + $0x8] sm:$0xf]
  %v24 = vld [vmem:[%s1 + $0xc] sm:$0xf]
  %v25 = vld [vmem:[%s1 + $0x10] sm:$0xf]
  %v26 = vld [vmem:[%s1 + $0x14] sm:$0xf]
  %v27 = vld [vmem:[%s1 + $0x18] sm:$0xf]
  %v28 = vld [vmem:[%s1 + $0x1c] sm:$0xf]
  %v29 = vld [vmem:[%s1 + $0x20] sm:$0xf]
  %v30 = vld [vmem:[%s1 + $0x24] sm:$0xf]
  %v31 = vld [vmem:[%s1 + $0x28] sm:$0xf]
  %v32 = vld [vmem:[%s1 + $0x2c] sm:$0xf]
  %v33 = vld [vmem:[%s1 + $0x30] sm:$0xf]
  %v34 = vld [vmem:[%s1 + $0x34] sm:$0xf]
  %v35 = vld [vmem:[%s1 + $0x38] sm:$0xf]
  %v36 = vld [vmem:[%s1 + $0x3c] sm:$0xf]
  %v37 = vld [vmem:[%s2] sm:$0x1]
  %v39 = vlaneseq
  %v40 = vshrl.u32 %v39, 7
  %v41 = vsub.s32 0, %v40
  %v42 = vrot.slane %v37, %v41
  %v60 = vunpack.c.l.b16 %v21
  %v61 = vunpack.c.l.b16 %v22
  %v62 = vunpack.c.l.b16 %v23
  %v63 = vunpack.c.l.b16 %v24
  %v64 = vunpack.c.l.b16 %v25
  %v65 = vunpack.c.l.b16 %v26
  %v66 = vunpack.c.l.b16 %v27
  %v67 = vunpack.c.l.b16 %v28
  %v68 = vunpack.c.l.b16 %v29
  %v69 = vunpack.c.l.b16 %v30
  %v70 = vunpack.c.l.b16 %v31
  %v71 = vunpack.c.l.b16 %v32
  %v72 = vunpack.c.l.b16 %v33
  %v73 = vunpack.c.l.b16 %v34
  %v74 = vunpack.c.l.b16 %v35
  %v75 = vunpack.c.l.b16 %v36
  %v76 = vpack.c.b16 %v61, %v60
  %v77 = vpack.c.b16 %v63, %v62
  %v78 = vpack.c.b16 %v65, %v64
  %v79 = vpack.c.b16 %v67, %v66
  %v80 = vpack.c.b16 %v69, %v68
  %v81 = vpack.c.b16 %v71, %v70
  %v82 = vpack.c.b16 %v73, %v72
  %v83 = vpack.c.b16 %v75, %v74
  %92 = vmatprep.subr.bf16.mxu0 0
  %93 = vmatpush1.bf16.msra.mxu0 %v76
  %94 = vmatprep.subr.bf16.mxu0 0
  %95 = vmatpush1.bf16.msra.mxu0 %v77
  %96 = vmatprep.subr.bf16.mxu0 0
  %97 = vmatpush1.bf16.msra.mxu0 %v78
  %98 = vmatprep.subr.bf16.mxu0 0
  %99 = vmatpush1.bf16.msra.mxu0 %v79
  %100 = vmatprep.subr.bf16.mxu0 0
  %101 = vmatpush1.bf16.msra.mxu0 %v80
  %102 = vmatprep.subr.bf16.mxu0 0
  %103 = vmatpush1.bf16.msra.mxu0 %v81
  %104 = vmatprep.subr.bf16.mxu0 0
  %105 = vmatpush1.bf16.msra.mxu0 %v82
  %106 = vmatprep.subr.bf16.mxu0 0
  %107 = vmatpush1.bf16.msra.mxu0 %v83
  %108 = vmatprep.subr.bf16.mxu0 0
  %109 = vmatpush1.bf16.msra.mxu0 0
  %110 = vmatprep.subr.bf16.mxu0 0
  %111 = vmatpush1.bf16.msra.mxu0 0
  %112 = vmatprep.subr.bf16.mxu0 0
  %113 = vmatpush1.bf16.msra.mxu0 0
  %114 = vmatprep.subr.bf16.mxu0 0
  %115 = vmatpush1.bf16.msra.mxu0 0
  %116 = vmatprep.subr.bf16.mxu0 0
  %117 = vmatpush1.bf16.msra.mxu0 0
  %118 = vmatprep.subr.bf16.mxu0 0
  %119 = vmatpush1.bf16.msra.mxu0 0
  %120 = vmatprep.subr.bf16.mxu0 0
  %121 = vmatpush1.bf16.msra.mxu0 0
  %122 = vmatprep.subr.bf16.mxu0 0
  %123 = vmatpush1.bf16.msra.mxu0 0
  %124 = vmatprep.mubr.bf16.mxu0 0
  %125 = vmatmul.mubr.bf16.gmra.mrb[0].mxu0 %v19
  %v126 = vpop.f32.mrb[0].mxu0
  %v127 = vadd.f32 %v42, %v126
  %v128 = vpop.f32.mrb[0].mxu0
  %v129 = vpop.f32.mrb[0].mxu0
  %v130 = vadd.f32 %v42, %v129
  %v131 = vpop.f32.mrb[0].mxu0
  %132 = vmatprep.mubr.bf16.mxu0 0
  %133 = vmatmul.mubr.bf16.gmra.mrb[0].mxu0 %v20
  %v134 = vpop.f32.mrb[0].mxu0
  %v135 = vadd.f32 %v42, %v134
  %v136 = vpop.f32.mrb[0].mxu0
  %v137 = vpop.f32.mrb[0].mxu0
  %v138 = vadd.f32 %v42, %v137
  %v139 = vpop.f32.mrb[0].mxu0
  %140 = vdwg.mxu0
  %141 = vst [vmem:[%s3] sm:$0xff] %v127
  %142 = vst [vmem:[%s3 + $0x8] sm:$0xff] %v130
  %143 = vst [vmem:[%s3 + $0x10] sm:$0xff] %v135
  %144 = vst [vmem:[%s3 + $0x18] sm:$0xff] %v138
  // Predicated region
  $region14: #{transformer_forward.3} parent=0 // pred_check
    _
  $region15: #{transformer_forward.3} parent=0 // pred_check_branch
    %146 = sbr.rel (0) target = $region17
  $region16: #{transformer_forward.3} parent=0 // pred_region
    _
  $region17: #{transformer_forward.3} parent=0 // pred_fallthru
    _
  // Predicated region
  $region18: #{transformer_forward.3} parent=0 // pred_check
    _
  $region19: #{transformer_forward.3} parent=0 // pred_check_branch
    %148 = sbr.rel (0) target = $region21
  $region20: #{transformer_forward.3} parent=0 // pred_region
    _
  $region21: #{transformer_forward.3} parent=0 // pred_fallthru
    _

// kernel: transformer_forward.2
$region0: #{transformer_forward.2}
  #allocation0 [shape = 'u32[]', space=smem, size = 0x4, offset = 0x4, fixed_abs, tag = 'smem constant byte address 0x4 - core index']
  #allocation1 [shape = 'u32[144,128]{1,0:T(1,128)}', space=vmem, size = 0x12000, scoped, tag = 'internal scratch']
  %s0 = inlined_call_operand.vmem [shape: f32[32,128], index: 0, kind: input, shape index: {}]
  %s1 = inlined_call_operand.vmem [shape: f32[16,16], index: 1, kind: input, shape index: {}]
  %s2 = inlined_call_operand.vmem [shape: bf16[2,128,384], index: 2, kind: input, shape index: {}]
  %s3 = inlined_call_operand.vmem [shape: f32[2,1,384], index: 3, kind: input, shape index: {}]
  %s4 = inlined_call_operand.vmem [shape: bf16[2,128,128], index: 4, kind: input, shape index: {}]
  %s5 = inlined_call_operand.vmem [shape: f32[2,1,128], index: 5, kind: input, shape index: {}]
  %s6 = inlined_call_operand.hbm [shape: bf16[2,128,256], index: 6, kind: input, shape index: {}]
  %s7 = inlined_call_operand.vmem [shape: f32[2,1,256], index: 7, kind: input, shape index: {}]
  %s8 = inlined_call_operand.hbm [shape: bf16[2,256,128], index: 8, kind: input, shape index: {}]
  %s9 = inlined_call_operand.vmem [shape: f32[2,1,128], index: 9, kind: input, shape index: {}]
  %s10 = inlined_call_operand.vmem [shape: f32[2,1,128], index: 10, kind: input, shape index: {}]
  %s11 = inlined_call_operand.vmem [shape: f32[2,1,128], index: 11, kind: input, shape index: {}]
  %s12 = inlined_call_operand.vmem [shape: f32[2,1,128], index: 12, kind: input, shape index: {}]
  %s13 = inlined_call_operand.vmem [shape: f32[2,1,128], index: 13, kind: input, shape index: {}]
  %s14 = inlined_call_operand.vmem [shape: f32[32,128], index: 14, kind: output, shape index: {}]
  %s15 = sld [smem:[#allocation0]]
  $region101: #{transformer_forward.2} parent=0
    _
  %s17 = ssub.s32 1, %s15
  %s18 = scalar_select 0, %s17, %s15
  $region1: #{transformer_forward.2} parent=0
    #allocation2 [shape = 'u8[131072]{0}', space=vmem, size = 0x20000, scoped, tag = 'input window, operand 6']
    #allocation3 [shape = 's32[2]{0}', space=sflag, size = 0x8, scoped, tag = 'scoped memory for transformer_forward.2']
    #allocation4 [shape = 'u8[131072]{0}', space=vmem, size = 0x20000, scoped, tag = 'input window, operand 8']
    #allocation5 [shape = 's32[2]{0}', space=sflag, size = 0x8, scoped, tag = 'scoped memory for transformer_forward.2']
    %19 = vsyncpa [#allocation3], 0
    %s20 = scalar_lea.sflag [#allocation3], 1
    %21 = vsyncpa %s20, 0
    %22 = vsyncpa [#allocation5], 0
    %s23 = scalar_lea.sflag [#allocation5], 1
    %24 = vsyncpa %s23, 0
    loop: start=0, step=1, limit=4
    $region2: #{transformer_forward.2} parent=1 // loop_pre_header
      _
    $region3: #{transformer_forward.2} parent=1 // loop_header
      %s26 = sphi 0, %s30
      %p27 = scmp.ge.s32.totalorder %s26, 4
      %s33 = sphi 0, %s45
      %s34 = sphi 0, %s41
      %s35 = sphi 0, %s33
      %s36 = sphi 0, %s34
      %s37 = sphi 0, %s35
      %s38 = sphi 0, %s36
      %s48 = sphi 0, %s50
      %s51 = sphi 0, %s48
      %s52 = sphi 0, %s51
      %s68 = sphi 0, %s52
      %s72 = sphi 0, %s72
      %s74 = sphi 0, %s72
      %s75 = sphi 0, %s74
      %s89 = sphi 0, %s75
      %s95 = sphi 0, %s97
      %s98 = sphi 0, %s95
      %s99 = sphi 0, %s98
      %s115 = sphi 0, %s99
      %s121 = sphi 0, %s123
      %s124 = sphi 0, %s121
      %s125 = sphi 0, %s124
      %s141 = sphi 0, %s125
      %s147 = sphi 0, %s149
      %s150 = sphi 0, %s147
      %s151 = sphi 0, %s150
      %s167 = sphi 0, %s151
      %s173 = sphi 0, %s175
      %s176 = sphi 0, %s173
      %s177 = sphi 0, %s176
      %s193 = sphi 0, %s177
      %s199 = sphi 0, %s201
      %s202 = sphi 0, %s199
      %s203 = sphi 0, %s202
      %s219 = sphi 0, %s203
      %s225 = sphi 0, %s227
      %s228 = sphi 0, %s225
      %s229 = sphi 0, %s228
      %s245 = sphi 0, %s229
      %s251 = sphi 0, %s253
      %s254 = sphi 0, %s251
      %s255 = sphi 0, %s254
      %s271 = sphi 0, %s255
      %s277 = sphi 0, %s279
      %s280 = sphi 0, %s277
      %s281 = sphi 0, %s280
      %s297 = sphi 0, %s281
      %s303 = sphi 0, %s305
      %s306 = sphi 0, %s303
      %s307 = sphi 0, %s306
      %s323 = sphi 0, %s307
      %s329 = sphi 0, %s331
      %s332 = sphi 0, %s329
      %s333 = sphi 0, %s332
      %s349 = sphi 0, %s333
      %s355 = sphi 0, %s357
      %s358 = sphi 0, %s355
      %s359 = sphi 0, %s358
      %s375 = sphi 0, %s359
      %s381 = sphi 0, %s383
      %s384 = sphi 0, %s381
      %s385 = sphi 0, %s384
      %s401 = sphi 0, %s385
      %s407 = sphi 0, %s409
      %s410 = sphi 0, %s407
      %s411 = sphi 0, %s410
      %s427 = sphi 0, %s411
    $region4: #{transformer_forward.2} parent=1 // loop_header_branch
      %29 = sbr.rel (%p27) target = $region8
    $region5: #{transformer_forward.2} parent=1 // loop_body
      %s31 = ssub.s32 %s26, 1
      %s32 = ssub.s32 %s26, 2
      %s39 = sadd.s32 1, %s34
      %p40 = scmp.ge.s32.totalorder %s39, 2
      %s41 = scalar_select %p40, 0, %s39
      %s42 = sadd.s32 1, %s33
      %s43 = scalar_select %p40, %s42, %s33
      %p44 = scmp.ge.s32.totalorder %s43, 1
      %s45 = scalar_select %p44, 0, %s43
      %s46 = ssub.s32 %s33, %s45
      %p47 = scmp.eq.s32.totalorder %s46, 0
      %s49 = sadd.s32 %s48, 1
      %s50 = scalar_select %p47, %s48, %s49
      %p53 = pneg %p47
      %p54 = scmp.eq.s32.totalorder %s26, 1
      %p55 = por %p53, %p54
      %p56 = scmp.ne.s32.totalorder %s48, %s51
      %p57 = scmp.eq.s32.totalorder %s26, 0
      %p58 = por %p56, %p57
      %p59 = scmp.ne.s32.totalorder %s48, %s51
      %p60 = scmp.eq.s32.totalorder %s31, 1
      %p61 = por %p59, %p60
      %p62 = scmp.ne.s32.totalorder %s51, %s52
      %p63 = scmp.eq.s32.totalorder %s31, 0
      %p64 = por %p62, %p63
      %p65 = scmp.ne.s32.totalorder %s51, %s52
      %p66 = scmp.eq.s32.totalorder %s32, 1
      %p67 = por %p65, %p66
      %p69 = scmp.ne.s32.totalorder %s52, %s68
      %p70 = scmp.eq.s32.totalorder %s32, 0
      %p71 = por %p69, %p70
      %s73 = sadd.s32 %s72, 1
      %p76 = scmp.eq.s32.totalorder %s26, 1
      %p77 = scmp.ne.s32.totalorder %s72, %s74
      %p78 = scmp.eq.s32.totalorder %s26, 0
      %p79 = por %p77, %p78
      %p80 = scmp.ne.s32.totalorder %s72, %s74
      %p81 = scmp.eq.s32.totalorder %s31, 1
      %p82 = por %p80, %p81
      %p83 = scmp.ne.s32.totalorder %s74, %s75
      %p84 = scmp.eq.s32.totalorder %s31, 0
      %p85 = por %p83, %p84
      %p86 = scmp.ne.s32.totalorder %s74, %s75
      %p87 = scmp.eq.s32.totalorder %s32, 1
      %p88 = por %p86, %p87
      %p90 = scmp.ne.s32.totalorder %s75, %s89
      %p91 = scmp.eq.s32.totalorder %s32, 0
      %p92 = por %p90, %p91
      %s93 = ssub.s32 %s34, %s41
      %p94 = scmp.eq.s32.totalorder %s93, 0
      %s96 = sadd.s32 %s95, 1
      %s97 = scalar_select %p94, %s95, %s96
      %p100 = pneg %p94
      %p101 = scmp.eq.s32.totalorder %s26, 1
      %p102 = por %p100, %p101
      %p103 = scmp.ne.s32.totalorder %s95, %s98
      %p104 = scmp.eq.s32.totalorder %s26, 0
      %p105 = por %p103, %p104
      %p106 = scmp.ne.s32.totalorder %s95, %s98
      %p107 = scmp.eq.s32.totalorder %s31, 1
      %p108 = por %p106, %p107
      %p109 = scmp.ne.s32.totalorder %s98, %s99
      %p110 = scmp.eq.s32.totalorder %s31, 0
      %p111 = por %p109, %p110
      %p112 = scmp.ne.s32.totalorder %s98, %s99
      %p113 = scmp.eq.s32.totalorder %s32, 1
      %p114 = por %p112, %p113
      %p116 = scmp.ne.s32.totalorder %s99, %s115
      %p117 = scmp.eq.s32.totalorder %s32, 0
      %p118 = por %p116, %p117
      %s119 = ssub.s32 %s34, %s41
      %p120 = scmp.eq.s32.totalorder %s119, 0
      %s122 = sadd.s32 %s121, 1
      %s123 = scalar_select %p120, %s121, %s122
      %p126 = pneg %p120
      %p127 = scmp.eq.s32.totalorder %s26, 1
      %p128 = por %p126, %p127
      %p129 = scmp.ne.s32.totalorder %s121, %s124
      %p130 = scmp.eq.s32.totalorder %s26, 0
      %p131 = por %p129, %p130
      %p132 = scmp.ne.s32.totalorder %s121, %s124
      %p133 = scmp.eq.s32.totalorder %s31, 1
      %p134 = por %p132, %p133
      %p135 = scmp.ne.s32.totalorder %s124, %s125
      %p136 = scmp.eq.s32.totalorder %s31, 0
      %p137 = por %p135, %p136
      %p138 = scmp.ne.s32.totalorder %s124, %s125
      %p139 = scmp.eq.s32.totalorder %s32, 1
      %p140 = por %p138, %p139
      %p142 = scmp.ne.s32.totalorder %s125, %s141
      %p143 = scmp.eq.s32.totalorder %s32, 0
      %p144 = por %p142, %p143
      %s145 = ssub.s32 %s34, %s41
      %p146 = scmp.eq.s32.totalorder %s145, 0
      %s148 = sadd.s32 %s147, 1
      %s149 = scalar_select %p146, %s147, %s148
      %p152 = pneg %p146
      %p153 = scmp.eq.s32.totalorder %s26, 1
      %p154 = por %p152, %p153
      %p155 = scmp.ne.s32.totalorder %s147, %s150
      %p156 = scmp.eq.s32.totalorder %s26, 0
      %p157 = por %p155, %p156
      %p158 = scmp.ne.s32.totalorder %s147, %s150
      %p159 = scmp.eq.s32.totalorder %s31, 1
      %p160 = por %p158, %p159
      %p161 = scmp.ne.s32.totalorder %s150, %s151
      %p162 = scmp.eq.s32.totalorder %s31, 0
      %p163 = por %p161, %p162
      %p164 = scmp.ne.s32.totalorder %s150, %s151
      %p165 = scmp.eq.s32.totalorder %s32, 1
      %p166 = por %p164, %p165
      %p168 = scmp.ne.s32.totalorder %s151, %s167
      %p169 = scmp.eq.s32.totalorder %s32, 0
      %p170 = por %p168, %p169
      %s171 = ssub.s32 %s34, %s41
      %p172 = scmp.eq.s32.totalorder %s171, 0
      %s174 = sadd.s32 %s173, 1
      %s175 = scalar_select %p172, %s173, %s174
      %p178 = pneg %p172
      %p179 = scmp.eq.s32.totalorder %s26, 1
      %p180 = por %p178, %p179
      %p181 = scmp.ne.s32.totalorder %s173, %s176
      %p182 = scmp.eq.s32.totalorder %s26, 0
      %p183 = por %p181, %p182
      %p184 = scmp.ne.s32.totalorder %s173, %s176
      %p185 = scmp.eq.s32.totalorder %s31, 1
      %p186 = por %p184, %p185
      %p187 = scmp.ne.s32.totalorder %s176, %s177
      %p188 = scmp.eq.s32.totalorder %s31, 0
      %p189 = por %p187, %p188
      %p190 = scmp.ne.s32.totalorder %s176, %s177
      %p191 = scmp.eq.s32.totalorder %s32, 1
      %p192 = por %p190, %p191
      %p194 = scmp.ne.s32.totalorder %s177, %s193
      %p195 = scmp.eq.s32.totalorder %s32, 0
      %p196 = por %p194, %p195
      %s197 = ssub.s32 %s34, %s41
      %p198 = scmp.eq.s32.totalorder %s197, 0
      %s200 = sadd.s32 %s199, 1
      %s201 = scalar_select %p198, %s199, %s200
      %p204 = pneg %p198
      %p205 = scmp.eq.s32.totalorder %s26, 1
      %p206 = por %p204, %p205
      %p207 = scmp.ne.s32.totalorder %s199, %s202
      %p208 = scmp.eq.s32.totalorder %s26, 0
      %p209 = por %p207, %p208
      %p210 = scmp.ne.s32.totalorder %s199, %s202
      %p211 = scmp.eq.s32.totalorder %s31, 1
      %p212 = por %p210, %p211
      %p213 = scmp.ne.s32.totalorder %s202, %s203
      %p214 = scmp.eq.s32.totalorder %s31, 0
      %p215 = por %p213, %p214
      %p216 = scmp.ne.s32.totalorder %s202, %s203
      %p217 = scmp.eq.s32.totalorder %s32, 1
      %p218 = por %p216, %p217
      %p220 = scmp.ne.s32.totalorder %s203, %s219
      %p221 = scmp.eq.s32.totalorder %s32, 0
      %p222 = por %p220, %p221
      %s223 = ssub.s32 %s34, %s41
      %p224 = scmp.eq.s32.totalorder %s223, 0
      %s226 = sadd.s32 %s225, 1
      %s227 = scalar_select %p224, %s225, %s226
      %p230 = pneg %p224
      %p231 = scmp.eq.s32.totalorder %s26, 1
      %p232 = por %p230, %p231
      %p233 = scmp.ne.s32.totalorder %s225, %s228
      %p234 = scmp.eq.s32.totalorder %s26, 0
      %p235 = por %p233, %p234
      %p236 = scmp.ne.s32.totalorder %s225, %s228
      %p237 = scmp.eq.s32.totalorder %s31, 1
      %p238 = por %p236, %p237
      %p239 = scmp.ne.s32.totalorder %s228, %s229
      %p240 = scmp.eq.s32.totalorder %s31, 0
      %p241 = por %p239, %p240
      %p242 = scmp.ne.s32.totalorder %s228, %s229
      %p243 = scmp.eq.s32.totalorder %s32, 1
      %p244 = por %p242, %p243
      %p246 = scmp.ne.s32.totalorder %s229, %s245
      %p247 = scmp.eq.s32.totalorder %s32, 0
      %p248 = por %p246, %p247
      %s249 = ssub.s32 %s34, %s41
      %p250 = scmp.eq.s32.totalorder %s249, 0
      %s252 = sadd.s32 %s251, 1
      %s253 = scalar_select %p250, %s251, %s252
      %p256 = pneg %p250
      %p257 = scmp.eq.s32.totalorder %s26, 1
      %p258 = por %p256, %p257
      %p259 = scmp.ne.s32.totalorder %s251, %s254
      %p260 = scmp.eq.s32.totalorder %s26, 0
      %p261 = por %p259, %p260
      %p262 = scmp.ne.s32.totalorder %s251, %s254
      %p263 = scmp.eq.s32.totalorder %s31, 1
      %p264 = por %p262, %p263
      %p265 = scmp.ne.s32.totalorder %s254, %s255
      %p266 = scmp.eq.s32.totalorder %s31, 0
      %p267 = por %p265, %p266
      %p268 = scmp.ne.s32.totalorder %s254, %s255
      %p269 = scmp.eq.s32.totalorder %s32, 1
      %p270 = por %p268, %p269
      %p272 = scmp.ne.s32.totalorder %s255, %s271
      %p273 = scmp.eq.s32.totalorder %s32, 0
      %p274 = por %p272, %p273
      %s275 = ssub.s32 %s34, %s41
      %p276 = scmp.eq.s32.totalorder %s275, 0
      %s278 = sadd.s32 %s277, 1
      %s279 = scalar_select %p276, %s277, %s278
      %p282 = pneg %p276
      %p283 = scmp.eq.s32.totalorder %s26, 1
      %p284 = por %p282, %p283
      %p285 = scmp.ne.s32.totalorder %s277, %s280
      %p286 = scmp.eq.s32.totalorder %s26, 0
      %p287 = por %p285, %p286
      %p288 = scmp.ne.s32.totalorder %s277, %s280
      %p289 = scmp.eq.s32.totalorder %s31, 1
      %p290 = por %p288, %p289
      %p291 = scmp.ne.s32.totalorder %s280, %s281
      %p292 = scmp.eq.s32.totalorder %s31, 0
      %p293 = por %p291, %p292
      %p294 = scmp.ne.s32.totalorder %s280, %s281
      %p295 = scmp.eq.s32.totalorder %s32, 1
      %p296 = por %p294, %p295
      %p298 = scmp.ne.s32.totalorder %s281, %s297
      %p299 = scmp.eq.s32.totalorder %s32, 0
      %p300 = por %p298, %p299
      %s301 = ssub.s32 %s34, %s41
      %p302 = scmp.eq.s32.totalorder %s301, 0
      %s304 = sadd.s32 %s303, 1
      %s305 = scalar_select %p302, %s303, %s304
      %p308 = pneg %p302
      %p309 = scmp.eq.s32.totalorder %s26, 1
      %p310 = por %p308, %p309
      %p311 = scmp.ne.s32.totalorder %s303, %s306
      %p312 = scmp.eq.s32.totalorder %s26, 0
      %p313 = por %p311, %p312
      %p314 = scmp.ne.s32.totalorder %s303, %s306
      %p315 = scmp.eq.s32.totalorder %s31, 1
      %p316 = por %p314, %p315
      %p317 = scmp.ne.s32.totalorder %s306, %s307
      %p318 = scmp.eq.s32.totalorder %s31, 0
      %p319 = por %p317, %p318
      %p320 = scmp.ne.s32.totalorder %s306, %s307
      %p321 = scmp.eq.s32.totalorder %s32, 1
      %p322 = por %p320, %p321
      %p324 = scmp.ne.s32.totalorder %s307, %s323
      %p325 = scmp.eq.s32.totalorder %s32, 0
      %p326 = por %p324, %p325
      %s327 = ssub.s32 %s34, %s41
      %p328 = scmp.eq.s32.totalorder %s327, 0
      %s330 = sadd.s32 %s329, 1
      %s331 = scalar_select %p328, %s329, %s330
      %p334 = pneg %p328
      %p335 = scmp.eq.s32.totalorder %s26, 1
      %p336 = por %p334, %p335
      %p337 = scmp.ne.s32.totalorder %s329, %s332
      %p338 = scmp.eq.s32.totalorder %s26, 0
      %p339 = por %p337, %p338
      %p340 = scmp.ne.s32.totalorder %s329, %s332
      %p341 = scmp.eq.s32.totalorder %s31, 1
      %p342 = por %p340, %p341
      %p343 = scmp.ne.s32.totalorder %s332, %s333
      %p344 = scmp.eq.s32.totalorder %s31, 0
      %p345 = por %p343, %p344
      %p346 = scmp.ne.s32.totalorder %s332, %s333
      %p347 = scmp.eq.s32.totalorder %s32, 1
      %p348 = por %p346, %p347
      %p350 = scmp.ne.s32.totalorder %s333, %s349
      %p351 = scmp.eq.s32.totalorder %s32, 0
      %p352 = por %p350, %p351
      %s353 = ssub.s32 %s34, %s41
      %p354 = scmp.eq.s32.totalorder %s353, 0
      %s356 = sadd.s32 %s355, 1
      %s357 = scalar_select %p354, %s355, %s356
      %p360 = pneg %p354
      %p361 = scmp.eq.s32.totalorder %s26, 1
      %p362 = por %p360, %p361
      %p363 = scmp.ne.s32.totalorder %s355, %s358
      %p364 = scmp.eq.s32.totalorder %s26, 0
      %p365 = por %p363, %p364
      %p366 = scmp.ne.s32.totalorder %s355, %s358
      %p367 = scmp.eq.s32.totalorder %s31, 1
      %p368 = por %p366, %p367
      %p369 = scmp.ne.s32.totalorder %s358, %s359
      %p370 = scmp.eq.s32.totalorder %s31, 0
      %p371 = por %p369, %p370
      %p372 = scmp.ne.s32.totalorder %s358, %s359
      %p373 = scmp.eq.s32.totalorder %s32, 1
      %p374 = por %p372, %p373
      %p376 = scmp.ne.s32.totalorder %s359, %s375
      %p377 = scmp.eq.s32.totalorder %s32, 0
      %p378 = por %p376, %p377
      %s379 = ssub.s32 %s34, %s41
      %p380 = scmp.eq.s32.totalorder %s379, 0
      %s382 = sadd.s32 %s381, 1
      %s383 = scalar_select %p380, %s381, %s382
      %p386 = pneg %p380
      %p387 = scmp.eq.s32.totalorder %s26, 1
      %p388 = por %p386, %p387
      %p389 = scmp.ne.s32.totalorder %s381, %s384
      %p390 = scmp.eq.s32.totalorder %s26, 0
      %p391 = por %p389, %p390
      %p392 = scmp.ne.s32.totalorder %s381, %s384
      %p393 = scmp.eq.s32.totalorder %s31, 1
      %p394 = por %p392, %p393
      %p395 = scmp.ne.s32.totalorder %s384, %s385
      %p396 = scmp.eq.s32.totalorder %s31, 0
      %p397 = por %p395, %p396
      %p398 = scmp.ne.s32.totalorder %s384, %s385
      %p399 = scmp.eq.s32.totalorder %s32, 1
      %p400 = por %p398, %p399
      %p402 = scmp.ne.s32.totalorder %s385, %s401
      %p403 = scmp.eq.s32.totalorder %s32, 0
      %p404 = por %p402, %p403
      %s405 = ssub.s32 %s33, %s45
      %p406 = scmp.eq.s32.totalorder %s405, 0
      %s408 = sadd.s32 %s407, 1
      %s409 = scalar_select %p406, %s407, %s408
      %p412 = pneg %p406
      %p413 = scmp.eq.s32.totalorder %s26, 1
      %p414 = por %p412, %p413
      %p415 = scmp.ne.s32.totalorder %s407, %s410
      %p416 = scmp.eq.s32.totalorder %s26, 0
      %p417 = por %p415, %p416
      %p418 = scmp.ne.s32.totalorder %s407, %s410
      %p419 = scmp.eq.s32.totalorder %s31, 1
      %p420 = por %p418, %p419
      %p421 = scmp.ne.s32.totalorder %s410, %s411
      %p422 = scmp.eq.s32.totalorder %s31, 0
      %p423 = por %p421, %p422
      %p424 = scmp.ne.s32.totalorder %s410, %s411
      %p425 = scmp.eq.s32.totalorder %s32, 1
      %p426 = por %p424, %p425
      %p428 = scmp.ne.s32.totalorder %s411, %s427
      %p429 = scmp.eq.s32.totalorder %s32, 0
      %p430 = por %p428, %p429
      %p431 = scmp.le.s32.totalorder 1, %s26
      %p432 = scmp.lt.s32.totalorder %s26, 3
      %p433 = pnand %p431, %p432
      %p434 = pneg %p433
      // Predicated region
      $region9: #{transformer_forward.2} parent=5 // pred_check
        _
      $region10: #{transformer_forward.2} parent=5 // pred_check_branch
        %436 = sbr.rel (%p433) target = $region12
      $region11: #{transformer_forward.2} parent=5 // pred_region
        %s437 = ssub.s32 %s26, 1
        // Predicated region
        $region13: #{transformer_forward.2} parent=11 // pred_check
          %p438 = pneg %p64
        $region14: #{transformer_forward.2} parent=11 // pred_check_branch
          %440 = sbr.rel (%p438) target = $region16
        $region15: #{transformer_forward.2} parent=11 // pred_region
          %s441 = smul.u32 4, %s35
          %p442 = scmp.lt.s32.totalorder %s441, 3
          %s443 = scalar_select %p442, %s441, 3
          %s444 = smul.addr %s443, 8
          %s445 = scalar_lea.vmem %s0, %s444
          %s446 = smul.u32 4, %s35
        $region16: #{transformer_forward.2} parent=11 // pred_fallthru
          _
        // Predicated region
        $region17: #{transformer_forward.2} parent=11 // pred_check
          %p447 = pneg %p85
        $region18: #{transformer_forward.2} parent=11 // pred_check_branch
          %449 = sbr.rel (%p447) target = $region20
        $region19: #{transformer_forward.2} parent=11 // pred_region
          _
        $region20: #{transformer_forward.2} parent=11 // pred_fallthru
          _
      $region12: #{transformer_forward.2} parent=5 // pred_fallthru
        _
      %p450 = scmp.lt.s32.totalorder %s26, 2
      // Predicated region
      $region21: #{transformer_forward.2} parent=5 // pred_check
        %p451 = pneg %p450
      $region22: #{transformer_forward.2} parent=5 // pred_check_branch
        %453 = sbr.rel (%p451) target = $region24
      $region23: #{transformer_forward.2} parent=5 // pred_region
        // Predicated region
        $region25: #{transformer_forward.2} parent=23 // pred_check
          %p454 = pneg %p105
        $region26: #{transformer_forward.2} parent=23 // pred_check_branch
          %456 = sbr.rel (%p454) target = $region28
        $region27: #{transformer_forward.2} parent=23 // pred_region
          %p457 = scmp.lt.s32.totalorder %s34, 1
          %s458 = scalar_select %p457, %s34, 1
          %s459 = smul.addr %s458, 48
          %s460 = smul.addr %s459, 4
          %s461 = scalar_lea.vmem %s2, %s460
        $region28: #{transformer_forward.2} parent=23 // pred_fallthru
          _
        // Predicated region
        $region29: #{transformer_forward.2} parent=23 // pred_check
          %p462 = pneg %p131
        $region30: #{transformer_forward.2} parent=23 // pred_check_branch
          %464 = sbr.rel (%p462) target = $region32
        $region31: #{transformer_forward.2} parent=23 // pred_region
          %p465 = scmp.lt.s32.totalorder %s34, 1
          %s466 = scalar_select %p465, %s34, 1
          %s467 = smul.addr %s466, 3
          %s468 = scalar_lea.vmem %s3, %s467
        $region32: #{transformer_forward.2} parent=23 // pred_fallthru
          _
        // Predicated region
        $region33: #{transformer_forward.2} parent=23 // pred_check
          %p469 = pneg %p157
        $region34: #{transformer_forward.2} parent=23 // pred_check_branch
          %471 = sbr.rel (%p469) target = $region36
        $region35: #{transformer_forward.2} parent=23 // pred_region
          %p472 = scmp.lt.s32.totalorder %s34, 1
          %s473 = scalar_select %p472, %s34, 1
          %s474 = smul.addr %s473, 16
          %s475 = smul.addr %s474, 4
          %s476 = scalar_lea.vmem %s4, %s475
        $region36: #{transformer_forward.2} parent=23 // pred_fallthru
          _
        // Predicated region
        $region37: #{transformer_forward.2} parent=23 // pred_check
          %p477 = pneg %p183
        $region38: #{transformer_forward.2} parent=23 // pred_check_branch
          %479 = sbr.rel (%p477) target = $region40
        $region39: #{transformer_forward.2} parent=23 // pred_region
          %p480 = scmp.lt.s32.totalorder %s34, 1
          %s481 = scalar_select %p480, %s34, 1
          %s482 = scalar_lea.vmem %s5, %s481
        $region40: #{transformer_forward.2} parent=23 // pred_fallthru
          _
        // Predicated region
        $region41: #{transformer_forward.2} parent=23 // pred_check
          %p483 = pneg %p209
        $region42: #{transformer_forward.2} parent=23 // pred_check_branch
          %485 = sbr.rel (%p483) target = $region44
        $region43: #{transformer_forward.2} parent=23 // pred_region
          %s486 = sand.u32 %s199, 1
          %s487 = scalar_lea.sflag [#allocation3], %s486
          %s488 = sand.u32 %s199, 1
          %s489 = smul.addr %s488, 128
          %s490 = scalar_lea.vmem [#allocation2], %s489
          %s492 = ssub.s32 2048, 2048
          %493 = vsyncadd %s487, %s492
          %s494 = smul.addr %s34, 32
          %s495 = smul.addr %s494, 64
          %s496 = scalar_lea.hbm %s6, %s495
          %s497 = sshll.u32 %s490, 4
          %s498 = int_to_ptr.vmem [resolvable:$true] %s497
          %503 = dma.hbm_to_vmem [thread:$0]  %s496, 2048, %s498, %s487, 128, 128, 8
        $region44: #{transformer_forward.2} parent=23 // pred_fallthru
          _
        // Predicated region
        $region45: #{transformer_forward.2} parent=23 // pred_check
          %p504 = pneg %p235
        $region46: #{transformer_forward.2} parent=23 // pred_check_branch
          %506 = sbr.rel (%p504) target = $region48
        $region47: #{transformer_forward.2} parent=23 // pred_region
          %p507 = scmp.lt.s32.totalorder %s34, 1
          %s508 = scalar_select %p507, %s34, 1
          %s509 = smul.addr %s508, 2
          %s510 = scalar_lea.vmem %s7, %s509
        $region48: #{transformer_forward.2} parent=23 // pred_fallthru
          _
        // Predicated region
        $region49: #{transformer_forward.2} parent=23 // pred_check
          %p511 = pneg %p261
        $region50: #{transformer_forward.2} parent=23 // pred_check_branch
          %513 = sbr.rel (%p511) target = $region52
        $region51: #{transformer_forward.2} parent=23 // pred_region
          %s514 = sand.u32 %s251, 1
          %s515 = scalar_lea.sflag [#allocation5], %s514
          %s516 = sand.u32 %s251, 1
          %s517 = smul.addr %s516, 128
          %s518 = scalar_lea.vmem [#allocation4], %s517
          %s520 = ssub.s32 2048, 2048
          %521 = vsyncadd %s515, %s520
          %s522 = smul.addr %s34, 32
          %s523 = smul.addr %s522, 64
          %s524 = scalar_lea.hbm %s8, %s523
          %s525 = sshll.u32 %s518, 4
          %s526 = int_to_ptr.vmem [resolvable:$true] %s525
          %531 = dma.hbm_to_vmem [thread:$0]  %s524, 2048, %s526, %s515, 64, 64, 4
        $region52: #{transformer_forward.2} parent=23 // pred_fallthru
          _
        // Predicated region
        $region53: #{transformer_forward.2} parent=23 // pred_check
          %p532 = pneg %p287
        $region54: #{transformer_forward.2} parent=23 // pred_check_branch
          %534 = sbr.rel (%p532) target = $region56
        $region55: #{transformer_forward.2} parent=23 // pred_region
          %p535 = scmp.lt.s32.totalorder %s34, 1
          %s536 = scalar_select %p535, %s34, 1
          %s537 = scalar_lea.vmem %s9, %s536
        $region56: #{transformer_forward.2} parent=23 // pred_fallthru
          _
        // Predicated region
        $region57: #{transformer_forward.2} parent=23 // pred_check
          %p538 = pneg %p313
        $region58: #{transformer_forward.2} parent=23 // pred_check_branch
          %540 = sbr.rel (%p538) target = $region60
        $region59: #{transformer_forward.2} parent=23 // pred_region
          %p541 = scmp.lt.s32.totalorder %s34, 1
          %s542 = scalar_select %p541, %s34, 1
          %s543 = scalar_lea.vmem %s10, %s542
        $region60: #{transformer_forward.2} parent=23 // pred_fallthru
          _
        // Predicated region
        $region61: #{transformer_forward.2} parent=23 // pred_check
          %p544 = pneg %p339
        $region62: #{transformer_forward.2} parent=23 // pred_check_branch
          %546 = sbr.rel (%p544) target = $region64
        $region63: #{transformer_forward.2} parent=23 // pred_region
          %p547 = scmp.lt.s32.totalorder %s34, 1
          %s548 = scalar_select %p547, %s34, 1
          %s549 = scalar_lea.vmem %s11, %s548
        $region64: #{transformer_forward.2} parent=23 // pred_fallthru
          _
        // Predicated region
        $region65: #{transformer_forward.2} parent=23 // pred_check
          %p550 = pneg %p365
        $region66: #{transformer_forward.2} parent=23 // pred_check_branch
          %552 = sbr.rel (%p550) target = $region68
        $region67: #{transformer_forward.2} parent=23 // pred_region
          %p553 = scmp.lt.s32.totalorder %s34, 1
          %s554 = scalar_select %p553, %s34, 1
          %s555 = scalar_lea.vmem %s12, %s554
        $region68: #{transformer_forward.2} parent=23 // pred_fallthru
          _
        // Predicated region
        $region69: #{transformer_forward.2} parent=23 // pred_check
          %p556 = pneg %p391
        $region70: #{transformer_forward.2} parent=23 // pred_check_branch
          %558 = sbr.rel (%p556) target = $region72
        $region71: #{transformer_forward.2} parent=23 // pred_region
          %p559 = scmp.lt.s32.totalorder %s34, 1
          %s560 = scalar_select %p559, %s34, 1
          %s561 = scalar_lea.vmem %s13, %s560
        $region72: #{transformer_forward.2} parent=23 // pred_fallthru
          _
      $region24: #{transformer_forward.2} parent=5 // pred_fallthru
        _
      %p562 = scmp.le.s32.totalorder 1, %s26
      %p563 = scmp.lt.s32.totalorder %s26, 3
      %p564 = pnand %p562, %p563
      %p565 = pneg %p564
      // Predicated region
      $region73: #{transformer_forward.2} parent=5 // pred_check
        _
      $region74: #{transformer_forward.2} parent=5 // pred_check_branch
        %567 = sbr.rel (%p564) target = $region76
      $region75: #{transformer_forward.2} parent=5 // pred_region
        %s568 = ssub.s32 %s26, 1
        %s569 = sand.u32 %s202, 1
        %s570 = scalar_lea.sflag [#allocation3], %s569
        %s571 = sand.u32 %s202, 1
        %s572 = smul.addr %s571, 128
        %s573 = scalar_lea.vmem [#allocation2], %s572
        // Predicated region
        $region77: #{transformer_forward.2} parent=75 // pred_check
          %p574 = pneg %p215
        $region78: #{transformer_forward.2} parent=75 // pred_check_branch
          %576 = sbr.rel (%p574) target = $region80
        $region79: #{transformer_forward.2} parent=75 // pred_region
          %577 = dma.done %s570, 2048
        $region80: #{transformer_forward.2} parent=75 // pred_fallthru
          _
        %s578 = sand.u32 %s254, 1
        %s579 = scalar_lea.sflag [#allocation5], %s578
        %s580 = sand.u32 %s254, 1
        %s581 = smul.addr %s580, 128
        %s582 = scalar_lea.vmem [#allocation4], %s581
        // Predicated region
        $region81: #{transformer_forward.2} parent=75 // pred_check
          %p583 = pneg %p267
        $region82: #{transformer_forward.2} parent=75 // pred_check_branch
          %585 = sbr.rel (%p583) target = $region84
        $region83: #{transformer_forward.2} parent=75 // pred_region
          %586 = dma.done %s579, 2048
        $region84: #{transformer_forward.2} parent=75 // pred_fallthru
          _
        %s587 = smul.u32 4, %s35
        %p588 = scmp.lt.s32.totalorder %s587, 3
        %s589 = scalar_select %p588, %s587, 3
        %s590 = smul.addr %s589, 8
        %s591 = scalar_lea.vmem %s0, %s590
        %p592 = pneg %p64
        %p593 = pneg %p61
        %p594 = pneg %p85
        %p595 = pneg %p82
        %p596 = scmp.lt.s32.totalorder %s36, 1
        %s597 = scalar_select %p596, %s36, 1
        %s598 = smul.addr %s597, 48
        %s599 = smul.addr %s598, 4
        %s600 = scalar_lea.vmem %s2, %s599
        %p601 = pneg %p111
        %p602 = pneg %p108
        %p603 = scmp.lt.s32.totalorder %s36, 1
        %s604 = scalar_select %p603, %s36, 1
        %s605 = smul.addr %s604, 3
        %s606 = scalar_lea.vmem %s3, %s605
        %p607 = pneg %p137
        %p608 = pneg %p134
        %p609 = scmp.lt.s32.totalorder %s36, 1
        %s610 = scalar_select %p609, %s36, 1
        %s611 = smul.addr %s610, 16
        %s612 = smul.addr %s611, 4
        %s613 = scalar_lea.vmem %s4, %s612
        %p614 = pneg %p163
        %p615 = pneg %p160
        %p616 = scmp.lt.s32.totalorder %s36, 1
        %s617 = scalar_select %p616, %s36, 1
        %s618 = scalar_lea.vmem %s5, %s617
        %p619 = pneg %p189
        %p620 = pneg %p186
        %s621 = sand.u32 %s202, 1
        %s622 = scalar_lea.sflag [#allocation3], %s621
        %s623 = sand.u32 %s202, 1
        %s624 = smul.addr %s623, 128
        %s625 = scalar_lea.vmem [#allocation2], %s624
        %p626 = pneg %p215
        %p627 = pneg %p212
        %p628 = scmp.lt.s32.totalorder %s36, 1
        %s629 = scalar_select %p628, %s36, 1
        %s630 = smul.addr %s629, 2
        %s631 = scalar_lea.vmem %s7, %s630
        %p632 = pneg %p241
        %p633 = pneg %p238
        %s634 = sand.u32 %s254, 1
        %s635 = scalar_lea.sflag [#allocation5], %s634
        %s636 = sand.u32 %s254, 1
        %s637 = smul.addr %s636, 128
        %s638 = scalar_lea.vmem [#allocation4], %s637
        %p639 = pneg %p267
        %p640 = pneg %p264
        %p641 = scmp.lt.s32.totalorder %s36, 1
        %s642 = scalar_select %p641, %s36, 1
        %s643 = scalar_lea.vmem %s9, %s642
        %p644 = pneg %p293
        %p645 = pneg %p290
        %p646 = scmp.lt.s32.totalorder %s36, 1
        %s647 = scalar_select %p646, %s36, 1
        %s648 = scalar_lea.vmem %s10, %s647
        %p649 = pneg %p319
        %p650 = pneg %p316
        %p651 = scmp.lt.s32.totalorder %s36, 1
        %s652 = scalar_select %p651, %s36, 1
        %s653 = scalar_lea.vmem %s11, %s652
        %p654 = pneg %p345
        %p655 = pneg %p342
        %p656 = scmp.lt.s32.totalorder %s36, 1
        %s657 = scalar_select %p656, %s36, 1
        %s658 = scalar_lea.vmem %s12, %s657
        %p659 = pneg %p371
        %p660 = pneg %p368
        %p661 = scmp.lt.s32.totalorder %s36, 1
        %s662 = scalar_select %p661, %s36, 1
        %s663 = scalar_lea.vmem %s13, %s662
        %p664 = pneg %p397
        %p665 = pneg %p394
        %p666 = pneg %p423
        %p667 = pneg %p420
        %s668 = smul.u32 4, %s35
        %p669 = scmp.lt.s32.totalorder %s668, 3
        %s670 = scalar_select %p669, %s668, 3
        %s671 = smul.addr %s670, 8
        %s672 = scalar_lea.vmem %s14, %s671
        %s673 = smul.u32 4, %s35
        %p674 = scmp.lt.s32.totalorder %s673, 3
        %s675 = scalar_select %p674, %s673, 3
        %s676 = smul.addr %s675, 8
        %s677 = scalar_lea.vmem %s0, %s676
        %s678 = smul.u32 4, %s35
        %p679 = scmp.lt.s32.totalorder %s36, 1
        %s680 = scalar_select %p679, %s36, 1
        %s681 = smul.addr %s680, 48
        %s682 = smul.addr %s681, 4
        %s683 = scalar_lea.vmem %s2, %s682
        %p684 = scmp.lt.s32.totalorder %s36, 1
        %s685 = scalar_select %p684, %s36, 1
        %s686 = smul.addr %s685, 3
        %s687 = scalar_lea.vmem %s3, %s686
        %p688 = scmp.lt.s32.totalorder %s36, 1
        %s689 = scalar_select %p688, %s36, 1
        %s690 = smul.addr %s689, 16
        %s691 = smul.addr %s690, 4
        %s692 = scalar_lea.vmem %s4, %s691
        %p693 = scmp.lt.s32.totalorder %s36, 1
        %s694 = scalar_select %p693, %s36, 1
        %s695 = scalar_lea.vmem %s5, %s694
        %p696 = scmp.lt.s32.totalorder %s36, 1
        %s697 = scalar_select %p696, %s36, 1
        %s698 = smul.addr %s697, 2
        %s699 = scalar_lea.vmem %s7, %s698
        %p700 = scmp.lt.s32.totalorder %s36, 1
        %s701 = scalar_select %p700, %s36, 1
        %s702 = scalar_lea.vmem %s9, %s701
        %p703 = scmp.lt.s32.totalorder %s36, 1
        %s704 = scalar_select %p703, %s36, 1
        %s705 = scalar_lea.vmem %s10, %s704
        %p706 = scmp.lt.s32.totalorder %s36, 1
        %s707 = scalar_select %p706, %s36, 1
        %s708 = scalar_lea.vmem %s11, %s707
        %p709 = scmp.lt.s32.totalorder %s36, 1
        %s710 = scalar_select %p709, %s36, 1
        %s711 = scalar_lea.vmem %s12, %s710
        %p712 = scmp.lt.s32.totalorder %s36, 1
        %s713 = scalar_select %p712, %s36, 1
        %s714 = scalar_lea.vmem %s13, %s713
        %s715 = smul.u32 4, %s35
        %p716 = scmp.lt.s32.totalorder %s715, 3
        %s717 = scalar_select %p716, %s715, 3
        %s718 = smul.addr %s717, 8
        %s719 = scalar_lea.vmem %s14, %s718
        %s720 = smul.u32 4, %s35
        %p722 = scmp.eq.s32.totalorder %s36, 0
        // Predicated region
        $region85: #{transformer_forward.2} parent=75 // pred_check
          %p723 = pneg %p722
        $region86: #{transformer_forward.2} parent=75 // pred_check_branch
          %725 = sbr.rel (%p723) target = $region88
        $region87: #{transformer_forward.2} parent=75 // pred_region
          %v726 = vld [vmem:[%s677] sm:$0xff]
          %v727 = vld [vmem:[%s677 + $0x8] sm:$0xff]
          %v728 = vld [vmem:[%s677 + $0x10] sm:$0xff]
          %v729 = vld [vmem:[%s677 + $0x18] sm:$0xff]
          %730 = vst [vmem:[%s719] sm:$0xff] %v726
          %731 = vst [vmem:[%s719 + $0x8] sm:$0xff] %v727
          %732 = vst [vmem:[%s719 + $0x10] sm:$0xff] %v728
          %733 = vst [vmem:[%s719 + $0x18] sm:$0xff] %v729
        $region88: #{transformer_forward.2} parent=75 // pred_fallthru
          _
        %v734 = vld [vmem:[%s719] sm:$0xff]
        %v735 = vld [vmem:[%s719 + $0x8] sm:$0xff]
        %v736 = vld [vmem:[%s719 + $0x10] sm:$0xff]
        %v737 = vld [vmem:[%s719 + $0x18] sm:$0xff]
        %v738 = vpack.c.bf16 %v735, %v734
        %v739 = vpack.c.bf16 %v737, %v736
        %v740 = vld [vmem:[%s683] sm:$0xff]
        %v741 = vld [vmem:[%s683 + $0x8] sm:$0xf]
        %v742 = vld [vmem:[%s683 + $0xc] sm:$0xff]
        %v743 = vld [vmem:[%s683 + $0x14] sm:$0xf]
        %v744 = vld [vmem:[%s683 + $0x18] sm:$0xff]
        %v745 = vld [vmem:[%s683 + $0x20] sm:$0xf]
        %v746 = vld [vmem:[%s683 + $0x24] sm:$0xff]
        %v747 = vld [vmem:[%s683 + $0x2c] sm:$0xf]
        %v748 = vld [vmem:[%s683 + $0x30] sm:$0xff]
        %v749 = vld [vmem:[%s683 + $0x38] sm:$0xf]
        %v750 = vld [vmem:[%s683 + $0x3c] sm:$0xff]
        %v751 = vld [vmem:[%s683 + $0x44] sm:$0xf]
        %v752 = vld [vmem:[%s683 + $0x48] sm:$0xff]
        %v753 = vld [vmem:[%s683 + $0x50] sm:$0xf]
        %v754 = vld [vmem:[%s683 + $0x54] sm:$0xff]
        %v755 = vld [vmem:[%s683 + $0x5c] sm:$0xf]
        %v756 = vld [vmem:[%s683 + $0x60] sm:$0xff]
        %v757 = vld [vmem:[%s683 + $0x68] sm:$0xf]
        %v758 = vld [vmem:[%s683 + $0x6c] sm:$0xff]
        %v759 = vld [vmem:[%s683 + $0x74] sm:$0xf]
        %v760 = vld [vmem:[%s683 + $0x78] sm:$0xff]
        %v761 = vld [vmem:[%s683 + $0x80] sm:$0xf]
        %v762 = vld [vmem:[%s683 + $0x84] sm:$0xff]
        %v763 = vld [vmem:[%s683 + $0x8c] sm:$0xf]
        %v764 = vld [vmem:[%s683 + $0x90] sm:$0xff]
        %v765 = vld [vmem:[%s683 + $0x98] sm:$0xf]
        %v766 = vld [vmem:[%s683 + $0x9c] sm:$0xff]
        %v767 = vld [vmem:[%s683 + $0xa4] sm:$0xf]
        %v768 = vld [vmem:[%s683 + $0xa8] sm:$0xff]
        %v769 = vld [vmem:[%s683 + $0xb0] sm:$0xf]
        %v770 = vld [vmem:[%s683 + $0xb4] sm:$0xff]
        %v771 = vld [vmem:[%s683 + $0xbc] sm:$0xf]
        %v772 = vld [vmem:[%s687] sm:$0x7]
        %v774 = vlaneseq
        %v775 = vshrl.u32 %v774, 7
        %v776 = vsub.s32 0, %v775
        %v777 = vrot.slane %v772, %v776
        %v778 = vlaneseq
        %v779 = vshrl.u32 %v778, 7
        %v780 = vsub.s32 1, %v779
        %v781 = vrot.slane %v772, %v780
        %v782 = vlaneseq
        %v783 = vshrl.u32 %v782, 7
        %v784 = vsub.s32 2, %v783
        %v785 = vrot.slane %v772, %v784
        %v821 = vunpack.c.l.b16 %v740
        %v822 = vunpack.c.h.b16 %v740
        %v823 = vunpack.c.l.b16 %v741
        %v824 = vunpack.c.l.b16 %v742
        %v825 = vunpack.c.h.b16 %v742
        %v826 = vunpack.c.l.b16 %v743
        %v827 = vunpack.c.l.b16 %v744
        %v828 = vunpack.c.h.b16 %v744
        %v829 = vunpack.c.l.b16 %v745
        %v830 = vunpack.c.l.b16 %v746
        %v831 = vunpack.c.h.b16 %v746
        %v832 = vunpack.c.l.b16 %v747
        %v833 = vunpack.c.l.b16 %v748
        %v834 = vunpack.c.h.b16 %v748
        %v835 = vunpack.c.l.b16 %v749
        %v836 = vunpack.c.l.b16 %v750
        %v837 = vunpack.c.h.b16 %v750
        %v838 = vunpack.c.l.b16 %v751
        %v839 = vunpack.c.l.b16 %v752
        %v840 = vunpack.c.h.b16 %v752
        %v841 = vunpack.c.l.b16 %v753
        %v842 = vunpack.c.l.b16 %v754
        %v843 = vunpack.c.h.b16 %v754
        %v844 = vunpack.c.l.b16 %v755
        %v845 = vunpack.c.l.b16 %v756
        %v846 = vunpack.c.h.b16 %v756
        %v847 = vunpack.c.l.b16 %v757
        %v848 = vunpack.c.l.b16 %v758
        %v849 = vunpack.c.h.b16 %v758
        %v850 = vunpack.c.l.b16 %v759
        %v851 = vunpack.c.l.b16 %v760
        %v852 = vunpack.c.h.b16 %v760
        %v853 = vunpack.c.l.b16 %v761
        %v854 = vunpack.c.l.b16 %v762
        %v855 = vunpack.c.h.b16 %v762
        %v856 = vunpack.c.l.b16 %v763
        %v857 = vunpack.c.l.b16 %v764
        %v858 = vunpack.c.h.b16 %v764
        %v859 = vunpack.c.l.b16 %v765
        %v860 = vunpack.c.l.b16 %v766
        %v861 = vunpack.c.h.b16 %v766
        %v862 = vunpack.c.l.b16 %v767
        %v863 = vunpack.c.l.b16 %v768
        %v864 = vunpack.c.h.b16 %v768
        %v865 = vunpack.c.l.b16 %v769
        %v866 = vunpack.c.l.b16 %v770
        %v867 = vunpack.c.h.b16 %v770
        %v868 = vunpack.c.l.b16 %v771
        %v869 = vpack.c.b16 %v824, %v821
        %v870 = vpack.c.b16 %v825, %v822
        %v871 = vpack.c.b16 %v826, %v823
        %v872 = vpack.c.b16 %v830, %v827
        %v873 = vpack.c.b16 %v831, %v828
        %v874 = vpack.c.b16 %v832, %v829
        %v875 = vpack.c.b16 %v836, %v833
        %v876 = vpack.c.b16 %v837, %v834
        %v877 = vpack.c.b16 %v838, %v835
        %v878 = vpack.c.b16 %v842, %v839
        %v879 = vpack.c.b16 %v843, %v840
        %v880 = vpack.c.b16 %v844, %v841
        %v881 = vpack.c.b16 %v848, %v845
        %v882 = vpack.c.b16 %v849, %v846
        %v883 = vpack.c.b16 %v850, %v847
        %v884 = vpack.c.b16 %v854, %v851
        %v885 = vpack.c.b16 %v855, %v852
        %v886 = vpack.c.b16 %v856, %v853
        %v887 = vpack.c.b16 %v860, %v857
        %v888 = vpack.c.b16 %v861, %v858
        %v889 = vpack.c.b16 %v862, %v859
        %v890 = vpack.c.b16 %v866, %v863
        %v891 = vpack.c.b16 %v867, %v864
        %v892 = vpack.c.b16 %v868, %v865
        %917 = vmatprep.subr.bf16.mxu0 %v870
        %918 = vmatpush1.bf16.msra.mxu0 %v869
        %919 = vmatprep.subr.bf16.mxu0 %v873
        %920 = vmatpush1.bf16.msra.mxu0 %v872
        %921 = vmatprep.subr.bf16.mxu0 %v876
        %922 = vmatpush1.bf16.msra.mxu0 %v875
        %923 = vmatprep.subr.bf16.mxu0 %v879
        %924 = vmatpush1.bf16.msra.mxu0 %v878
        %925 = vmatprep.subr.bf16.mxu0 %v882
        %926 = vmatpush1.bf16.msra.mxu0 %v881
        %927 = vmatprep.subr.bf16.mxu0 %v885
        %928 = vmatpush1.bf16.msra.mxu0 %v884
        %929 = vmatprep.subr.bf16.mxu0 %v888
        %930 = vmatpush1.bf16.msra.mxu0 %v887
        %931 = vmatprep.subr.bf16.mxu0 %v891
        %932 = vmatpush1.bf16.msra.mxu0 %v890
        %933 = vmatprep.subr.bf16.mxu0 0
        %934 = vmatpush1.bf16.msra.mxu0 0
        %935 = vmatprep.subr.bf16.mxu0 0
        %936 = vmatpush1.bf16.msra.mxu0 0
        %937 = vmatprep.subr.bf16.mxu0 0
        %938 = vmatpush1.bf16.msra.mxu0 0
        %939 = vmatprep.subr.bf16.mxu0 0
        %940 = vmatpush1.bf16.msra.mxu0 0
        %941 = vmatprep.subr.bf16.mxu0 0
        %942 = vmatpush1.bf16.msra.mxu0 0
        %943 = vmatprep.subr.bf16.mxu0 0
        %944 = vmatpush1.bf16.msra.mxu0 0
        %945 = vmatprep.subr.bf16.mxu0 0
        %946 = vmatpush1.bf16.msra.mxu0 0
        %947 = vmatprep.subr.bf16.mxu0 0
        %948 = vmatpush1.bf16.msra.mxu0 0
        %949 = vmatprep.mubr.bf16.mxu0 0
        %950 = vmatmul.mubr.bf16.gmra.mrb[0].mxu0 %v738
        %v951 = vpop.f32.mrb[0].mxu0
        %v952 = vadd.f32 %v777, %v951
        %v953 = vpop.f32.mrb[0].mxu0
        %v954 = vadd.f32 %v781, %v953
        %v955 = vpop.f32.mrb[0].mxu0
        %v956 = vadd.f32 %v777, %v955
        %v957 = vpop.f32.mrb[0].mxu0
        %v958 = vadd.f32 %v781, %v957
        %959 = vmatprep.mubr.bf16.mxu0 0
        %960 = vmatmul.mubr.bf16.gmra.mrb[0].mxu0 %v739
        %v961 = vpop.f32.mrb[0].mxu0
        %v962 = vadd.f32 %v777, %v961
        %v963 = vpop.f32.mrb[0].mxu0
        %v964 = vadd.f32 %v781, %v963
        %v965 = vpop.f32.mrb[0].mxu0
        %v966 = vadd.f32 %v777, %v965
        %v967 = vpop.f32.mrb[0].mxu0
        %v968 = vadd.f32 %v781, %v967
        %969 = vdwg.mxu0
        %970 = vmatprep.subr.bf16.mxu0 0
        %971 = vmatpush1.bf16.msra.mxu0 %v871
        %972 = vmatprep.subr.bf16.mxu0 0
        %973 = vmatpush1.bf16.msra.mxu0 %v874
        %974 = vmatprep.subr.bf16.mxu0 0
        %975 = vmatpush1.bf16.msra.mxu0 %v877
        %976 = vmatprep.subr.bf16.mxu0 0
        %977 = vmatpush1.bf16.msra.mxu0 %v880
        %978 = vmatprep.subr.bf16.mxu0 0
        %979 = vmatpush1.bf16.msra.mxu0 %v883
        %980 = vmatprep.subr.bf16.mxu0 0
        %981 = vmatpush1.bf16.msra.mxu0 %v886
        %982 = vmatprep.subr.bf16.mxu0 0
        %983 = vmatpush1.bf16.msra.mxu0 %v889
        %984 = vmatprep.subr.bf16.mxu0 0
        %985 = vmatpush1.bf16.msra.mxu0 %v892
        %986 = vmatprep.subr.bf16.mxu0 0
        %987 = vmatpush1.bf16.msra.mxu0 0
        %988 = vmatprep.subr.bf16.mxu0 0
        %989 = vmatpush1.bf16.msra.mxu0 0
        %990 = vmatprep.subr.bf16.mxu0 0
        %991 = vmatpush1.bf16.msra.mxu0 0
        %992 = vmatprep.subr.bf16.mxu0 0
        %993 = vmatpush1.bf16.msra.mxu0 0
        %994 = vmatprep.subr.bf16.mxu0 0
        %995 = vmatpush1.bf16.msra.mxu0 0
        %996 = vmatprep.subr.bf16.mxu0 0
        %997 = vmatpush1.bf16.msra.mxu0 0
        %998 = vmatprep.subr.bf16.mxu0 0
        %999 = vmatpush1.bf16.msra.mxu0 0
        %1000 = vmatprep.subr.bf16.mxu0 0
        %1001 = vmatpush1.bf16.msra.mxu0 0
        %1002 = vmatprep.mubr.bf16.mxu0 0
        %1003 = vmatmul.mubr.bf16.gmra.mrb[0].mxu0 %v738
        %v1004 = vpop.f32.mrb[0].mxu0
        %v1005 = vadd.f32 %v785, %v1004
        %v1006 = vpop.f32.mrb[0].mxu0
        %v1007 = vpop.f32.mrb[0].mxu0
        %v1008 = vadd.f32 %v785, %v1007
        %v1009 = vpop.f32.mrb[0].mxu0
        %1010 = vmatprep.mubr.bf16.mxu0 0
        %1011 = vmatmul.mubr.bf16.gmra.mrb[0].mxu0 %v739
        %v1012 = vpop.f32.mrb[0].mxu0
        %v1013 = vadd.f32 %v785, %v1012
        %v1014 = vpop.f32.mrb[0].mxu0
        %v1015 = vpop.f32.mrb[0].mxu0
        %v1016 = vadd.f32 %v785, %v1015
        %v1017 = vpop.f32.mrb[0].mxu0
        %1018 = vdwg.mxu0
        %v1019 = vpack.c.bf16 %v956, %v952
        %v1020 = vpack.c.bf16 %v966, %v962
        %v1021 = vpack.c.bf16 %v958, %v954
        %v1022 = vpack.c.bf16 %v968, %v964
        %v1023 = vpack.c.bf16 %v1008, %v1005
        %v1024 = vpack.c.bf16 %v1016, %v1013
        %v1025 = vld [vmem:[%s1] sm:$0xff]
        %v1026 = vld [vmem:[%s1 + $0x8] sm:$0xff]
        %vm1027 = vcmask 523264
        %v1029 = vsel %vm1027, %v1019, 0
        %v1032 = vsel %vm1027, %v1021, 0
        %1034 = vmatprep.subr.bf16.mxu0 0
        %1035 = vmatpush1.bf16.xpose.msra.mxu0 %v1032
        %1036 = vmatprep.subr.bf16.mxu0 0
        %1037 = vmatpush1.bf16.xpose.msra.mxu0 0
        %1038 = vmatprep.subr.bf16.mxu0 0
        %1039 = vmatpush1.bf16.xpose.msra.mxu0 0
        %1040 = vmatprep.subr.bf16.mxu0 0
        %1041 = vmatpush1.bf16.xpose.msra.mxu0 0
        %1042 = vmatprep.subr.bf16.mxu0 0
        %1043 = vmatpush1.bf16.xpose.msra.mxu0 0
        %1044 = vmatprep.subr.bf16.mxu0 0
        %1045 = vmatpush1.bf16.xpose.msra.mxu0 0
        %1046 = vmatprep.subr.bf16.mxu0 0
        %1047 = vmatpush1.bf16.xpose.msra.mxu0 0
        %1048 = vmatprep.subr.bf16.mxu0 0
        %1049 = vmatpush1.bf16.xpose.msra.mxu0 0
        %1050 = vmatprep.subr.bf16.mxu0 0
        %1051 = vmatpush1.bf16.xpose.msra.mxu0 0
        %1052 = vmatprep.subr.bf16.mxu0 0
        %1053 = vmatpush1.bf16.xpose.msra.mxu0 0
        %1054 = vmatprep.subr.bf16.mxu0 0
        %1055 = vmatpush1.bf16.xpose.msra.mxu0 0
        %1056 = vmatprep.subr.bf16.mxu0 0
        %1057 = vmatpush1.bf16.xpose.msra.mxu0 0
        %1058 = vmatprep.subr.bf16.mxu0 0
        %1059 = vmatpush1.bf16.xpose.msra.mxu0 0
        %1060 = vmatprep.subr.bf16.mxu0 0
        %1061 = vmatpush1.bf16.xpose.msra.mxu0 0
        %1062 = vmatprep.subr.bf16.mxu0 0
        %1063 = vmatpush1.bf16.xpose.msra.mxu0 0
        %1064 = vmatprep.subr.bf16.mxu0 0
        %1065 = vmatpush1.bf16.xpose.msra.mxu0 0
        %1066 = vmatprep.mubr.bf16.mxu0 0
        %1067 = vmatmul.mubr.bf16.gmra.mrb[0].mxu0 %v1029
        %v1068 = vpop.f32.mrb[0].mxu0
        %v1069 = vadd.f32 %v1025, %v1068
        %v1070 = vpop.f32.mrb[0].mxu0
        %v1071 = vpop.f32.mrb[0].mxu0
        %v1072 = vadd.f32 %v1026, %v1071
        %v1073 = vpop.f32.mrb[0].mxu0
        %1074 = vdwg.mxu0
        %v1076 = vsel %vm1027, %v1020, 0
        %v1079 = vsel %vm1027, %v1022, 0
        %1081 = vmatprep.subr.bf16.mxu0 0
        %1082 = vmatpush1.bf16.xpose.msra.mxu0 %v1079
        %1083 = vmatprep.subr.bf16.mxu0 0
        %1084 = vmatpush1.bf16.xpose.msra.mxu0 0
        %1085 = vmatprep.subr.bf16.mxu0 0
        %1086 = vmatpush1.bf16.xpose.msra.mxu0 0
        %1087 = vmatprep.subr.bf16.mxu0 0
        %1088 = vmatpush1.bf16.xpose.msra.mxu0 0
        %1089 = vmatprep.subr.bf16.mxu0 0
        %1090 = vmatpush1.bf16.xpose.msra.mxu0 0
        %1091 = vmatprep.subr.bf16.mxu0 0
        %1092 = vmatpush1.bf16.xpose.msra.mxu0 0
        %1093 = vmatprep.subr.bf16.mxu0 0
        %1094 = vmatpush1.bf16.xpose.msra.mxu0 0
        %1095 = vmatprep.subr.bf16.mxu0 0
        %1096 = vmatpush1.bf16.xpose.msra.mxu0 0
        %1097 = vmatprep.subr.bf16.mxu0 0
        %1098 = vmatpush1.bf16.xpose.msra.mxu0 0
        %1099 = vmatprep.subr.bf16.mxu0 0
        %1100 = vmatpush1.bf16.xpose.msra.mxu0 0
        %1101 = vmatprep.subr.bf16.mxu0 0
        %1102 = vmatpush1.bf16.xpose.msra.mxu0 0
        %1103 = vmatprep.subr.bf16.mxu0 0
        %1104 = vmatpush1.bf16.xpose.msra.mxu0 0
        %1105 = vmatprep.subr.bf16.mxu0 0
        %1106 = vmatpush1.bf16.xpose.msra.mxu0 0
        %1107 = vmatprep.subr.bf16.mxu0 0
        %1108 = vmatpush1.bf16.xpose.msra.mxu0 0
        %1109 = vmatprep.subr.bf16.mxu0 0
        %1110 = vmatpush1.bf16.xpose.msra.mxu0 0
        %1111 = vmatprep.subr.bf16.mxu0 0
        %1112 = vmatpush1.bf16.xpose.msra.mxu0 0
        %1113 = vmatprep.mubr.bf16.mxu0 0
        %1114 = vmatmul.mubr.bf16.gmra.mrb[0].mxu0 %v1076
        %v1115 = vpop.f32.mrb[0].mxu0
        %v1116 = vadd.f32 %v1025, %v1115
        %v1117 = vpop.f32.mrb[0].mxu0
        %v1118 = vpop.f32.mrb[0].mxu0
        %v1119 = vadd.f32 %v1026, %v1118
        %v1120 = vpop.f32.mrb[0].mxu0
        %1121 = vdwg.mxu0
        %vm1122 = vcmask 130048
        %v1123 = vsel %vm1122, %v1069, -inf
        %1124 = vmax.xlane.f32.xlu0 %v1123
        %v1125 = vpop.xlane.xlu0 %1124
        %v1126 = vsel %vm1122, %v1072, -inf
        %1127 = vmax.xlane.f32.xlu0 %v1126
        %v1128 = vpop.xlane.xlu0 %1127
        %v1129 = vsel %vm1122, %v1116, -inf
        %1130 = vmax.xlane.f32.xlu0 %v1129
        %v1131 = vpop.xlane.xlu0 %1130
        %v1132 = vsel %vm1122, %v1119, -inf
        %1133 = vmax.xlane.f32.xlu0 %v1132
        %v1134 = vpop.xlane.xlu0 %1133
        %v1135 = vsub.f32 %v1069, %v1125
        %v1136 = vsub.f32 %v1072, %v1128
        %v1137 = vsub.f32 %v1116, %v1131
        %v1138 = vsub.f32 %v1119, %v1134
        %v1139 = vmul.f32 %v1135, 1.442695
        %v1140 = vpow.pop %v1139
        %v1141 = vmul.f32 %v1136, 1.442695
        %v1142 = vpow.pop %v1141
        %v1143 = vmul.f32 %v1137, 1.442695
        %v1144 = vpow.pop %v1143
        %v1145 = vmul.f32 %v1138, 1.442695
        %v1146 = vpow.pop %v1145
        %v1147 = vsel %vm1122, %v1140, 0.0
        %1148 = vadd.xlane.f32.xlu0 %v1147
        %v1149 = vpop.xlane.xlu0 %1148
        %v1150 = vsel %vm1122, %v1142, 0.0
        %1151 = vadd.xlane.f32.xlu0 %v1150
        %v1152 = vpop.xlane.xlu0 %1151
        %v1153 = vsel %vm1122, %v1144, 0.0
        %1154 = vadd.xlane.f32.xlu0 %v1153
        %v1155 = vpop.xlane.xlu0 %1154
        %v1156 = vsel %vm1122, %v1146, 0.0
        %1157 = vadd.xlane.f32.xlu0 %v1156
        %v1158 = vpop.xlane.xlu0 %1157
        %v1159 = vrcp.pop %v1149
        %v1160 = vrcp.pop %v1152
        %v1161 = vrcp.pop %v1155
        %v1162 = vrcp.pop %v1158
        %v1163 = vmul.f32 %v1140, %v1159
        %v1164 = vmul.f32 %v1142, %v1160
        %v1165 = vmul.f32 %v1144, %v1161
        %v1166 = vmul.f32 %v1146, %v1162
        %v1167 = vpack.c.bf16 %v1164, %v1163
        %v1168 = vpack.c.bf16 %v1166, %v1165
        %v1170 = vsel %vm1122, %v1167, 0
        %1172 = vmatprep.subr.bf16.mxu0 0
        %1173 = vmatpush1.bf16.msra.mxu0 %v1023
        %1174 = vmatprep.subr.bf16.mxu0 0
        %1175 = vmatpush1.bf16.msra.mxu0 0
        %1176 = vmatprep.subr.bf16.mxu0 0
        %1177 = vmatpush1.bf16.msra.mxu0 0
        %1178 = vmatprep.subr.bf16.mxu0 0
        %1179 = vmatpush1.bf16.msra.mxu0 0
        %1180 = vmatprep.subr.bf16.mxu0 0
        %1181 = vmatpush1.bf16.msra.mxu0 0
        %1182 = vmatprep.subr.bf16.mxu0 0
        %1183 = vmatpush1.bf16.msra.mxu0 0
        %1184 = vmatprep.subr.bf16.mxu0 0
        %1185 = vmatpush1.bf16.msra.mxu0 0
        %1186 = vmatprep.subr.bf16.mxu0 0
        %1187 = vmatpush1.bf16.msra.mxu0 0
        %1188 = vmatprep.subr.bf16.mxu0 0
        %1189 = vmatpush1.bf16.msra.mxu0 0
        %1190 = vmatprep.subr.bf16.mxu0 0
        %1191 = vmatpush1.bf16.msra.mxu0 0
        %1192 = vmatprep.subr.bf16.mxu0 0
        %1193 = vmatpush1.bf16.msra.mxu0 0
        %1194 = vmatprep.subr.bf16.mxu0 0
        %1195 = vmatpush1.bf16.msra.mxu0 0
        %1196 = vmatprep.subr.bf16.mxu0 0
        %1197 = vmatpush1.bf16.msra.mxu0 0
        %1198 = vmatprep.subr.bf16.mxu0 0
        %1199 = vmatpush1.bf16.msra.mxu0 0
        %1200 = vmatprep.subr.bf16.mxu0 0
        %1201 = vmatpush1.bf16.msra.mxu0 0
        %1202 = vmatprep.subr.bf16.mxu0 0
        %1203 = vmatpush1.bf16.msra.mxu0 0
        %1204 = vmatprep.mubr.bf16.mxu0 0
        %1205 = vmatmul.mubr.bf16.gmra.mrb[0].mxu0 %v1170
        %v1206 = vpop.f32.mrb[0].mxu0
        %v1207 = vadd.f32 0.0, %v1206
        %v1208 = vpop.f32.mrb[0].mxu0
        %v1209 = vpop.f32.mrb[0].mxu0
        %v1210 = vadd.f32 0.0, %v1209
        %v1211 = vpop.f32.mrb[0].mxu0
        %1212 = vdwg.mxu0
        %v1214 = vsel %vm1122, %v1168, 0
        %1216 = vmatprep.subr.bf16.mxu0 0
        %1217 = vmatpush1.bf16.msra.mxu0 %v1024
        %1218 = vmatprep.subr.bf16.mxu0 0
        %1219 = vmatpush1.bf16.msra.mxu0 0
        %1220 = vmatprep.subr.bf16.mxu0 0
        %1221 = vmatpush1.bf16.msra.mxu0 0
        %1222 = vmatprep.subr.bf16.mxu0 0
        %1223 = vmatpush1.bf16.msra.mxu0 0
        %1224 = vmatprep.subr.bf16.mxu0 0
        %1225 = vmatpush1.bf16.msra.mxu0 0
        %1226 = vmatprep.subr.bf16.mxu0 0
        %1227 = vmatpush1.bf16.msra.mxu0 0
        %1228 = vmatprep.subr.bf16.mxu0 0
        %1229 = vmatpush1.bf16.msra.mxu0 0
        %1230 = vmatprep.subr.bf16.mxu0 0
        %1231 = vmatpush1.bf16.msra.mxu0 0
        %1232 = vmatprep.subr.bf16.mxu0 0
        %1233 = vmatpush1.bf16.msra.mxu0 0
        %1234 = vmatprep.subr.bf16.mxu0 0
        %1235 = vmatpush1.bf16.msra.mxu0 0
        %1236 = vmatprep.subr.bf16.mxu0 0
        %1237 = vmatpush1.bf16.msra.mxu0 0
        %1238 = vmatprep.subr.bf16.mxu0 0
        %1239 = vmatpush1.bf16.msra.mxu0 0
        %1240 = vmatprep.subr.bf16.mxu0 0
        %1241 = vmatpush1.bf16.msra.mxu0 0
        %1242 = vmatprep.subr.bf16.mxu0 0
        %1243 = vmatpush1.bf16.msra.mxu0 0
        %1244 = vmatprep.subr.bf16.mxu0 0
        %1245 = vmatpush1.bf16.msra.mxu0 0
        %1246 = vmatprep.subr.bf16.mxu0 0
        %1247 = vmatpush1.bf16.msra.mxu0 0
        %1248 = vmatprep.mubr.bf16.mxu0 0
        %1249 = vmatmul.mubr.bf16.gmra.mrb[0].mxu0 %v1214
        %v1250 = vpop.f32.mrb[0].mxu0
        %v1251 = vadd.f32 0.0, %v1250
        %v1252 = vpop.f32.mrb[0].mxu0
        %v1253 = vpop.f32.mrb[0].mxu0
        %v1254 = vadd.f32 0.0, %v1253
        %v1255 = vpop.f32.mrb[0].mxu0
        %1256 = vdwg.mxu0
        %1258 = vrot.lane.b32.xlu0 %v1019, 64
        %v1259 = vpop.permute.xlu0 %1258
        %1261 = vrot.lane.b32.xlu0 %v1021, 64
        %v1262 = vpop.permute.xlu0 %1261
        %v1264 = vsel %vm1027, %v1259, 0
        %v1267 = vsel %vm1027, %v1262, 0
        %1269 = vmatprep.subr.bf16.mxu0 0
        %1270 = vmatpush1.bf16.xpose.msra.mxu0 %v1267
        %1271 = vmatprep.subr.bf16.mxu0 0
        %1272 = vmatpush1.bf16.xpose.msra.mxu0 0
        %1273 = vmatprep.subr.bf16.mxu0 0
        %1274 = vmatpush1.bf16.xpose.msra.mxu0 0
        %1275 = vmatprep.subr.bf16.mxu0 0
        %1276 = vmatpush1.bf16.xpose.msra.mxu0 0
        %1277 = vmatprep.subr.bf16.mxu0 0
        %1278 = vmatpush1.bf16.xpose.msra.mxu0 0
        %1279 = vmatprep.subr.bf16.mxu0 0
        %1280 = vmatpush1.bf16.xpose.msra.mxu0 0
        %1281 = vmatprep.subr.bf16.mxu0 0
        %1282 = vmatpush1.bf16.xpose.msra.mxu0 0
        %1283 = vmatprep.subr.bf16.mxu0 0
        %1284 = vmatpush1.bf16.xpose.msra.mxu0 0
        %1285 = vmatprep.subr.bf16.mxu0 0
        %1286 = vmatpush1.bf16.xpose.msra.mxu0 0
        %1287 = vmatprep.subr.bf16.mxu0 0
        %1288 = vmatpush1.bf16.xpose.msra.mxu0 0
        %1289 = vmatprep.subr.bf16.mxu0 0
        %1290 = vmatpush1.bf16.xpose.msra.mxu0 0
        %1291 = vmatprep.subr.bf16.mxu0 0
        %1292 = vmatpush1.bf16.xpose.msra.mxu0 0
        %1293 = vmatprep.subr.bf16.mxu0 0
        %1294 = vmatpush1.bf16.xpose.msra.mxu0 0
        %1295 = vmatprep.subr.bf16.mxu0 0
        %1296 = vmatpush1.bf16.xpose.msra.mxu0 0
        %1297 = vmatprep.subr.bf16.mxu0 0
        %1298 = vmatpush1.bf16.xpose.msra.mxu0 0
        %1299 = vmatprep.subr.bf16.mxu0 0
        %1300 = vmatpush1.bf16.xpose.msra.mxu0 0
        %1301 = vmatprep.mubr.bf16.mxu0 0
        %1302 = vmatmul.mubr.bf16.gmra.mrb[0].mxu0 %v1264
        %v1303 = vpop.f32.mrb[0].mxu0
        %v1304 = vadd.f32 %v1025, %v1303
        %v1305 = vpop.f32.mrb[0].mxu0
        %v1306 = vpop.f32.mrb[0].mxu0
        %v1307 = vadd.f32 %v1026, %v1306
        %v1308 = vpop.f32.mrb[0].mxu0
        %1309 = vdwg.mxu0
        %1311 = vrot.lane.b32.xlu0 %v1020, 64
        %v1312 = vpop.permute.xlu0 %1311
        %1314 = vrot.lane.b32.xlu0 %v1022, 64
        %v1315 = vpop.permute.xlu0 %1314
        %v1317 = vsel %vm1027, %v1312, 0
        %v1320 = vsel %vm1027, %v1315, 0
        %1322 = vmatprep.subr.bf16.mxu0 0
        %1323 = vmatpush1.bf16.xpose.msra.mxu0 %v1320
        %1324 = vmatprep.subr.bf16.mxu0 0
        %1325 = vmatpush1.bf16.xpose.msra.mxu0 0
        %1326 = vmatprep.subr.bf16.mxu0 0
        %1327 = vmatpush1.bf16.xpose.msra.mxu0 0
        %1328 = vmatprep.subr.bf16.mxu0 0
        %1329 = vmatpush1.bf16.xpose.msra.mxu0 0
        %1330 = vmatprep.subr.bf16.mxu0 0
        %1331 = vmatpush1.bf16.xpose.msra.mxu0 0
        %1332 = vmatprep.subr.bf16.mxu0 0
        %1333 = vmatpush1.bf16.xpose.msra.mxu0 0
        %1334 = vmatprep.subr.bf16.mxu0 0
        %1335 = vmatpush1.bf16.xpose.msra.mxu0 0
        %1336 = vmatprep.subr.bf16.mxu0 0
        %1337 = vmatpush1.bf16.xpose.msra.mxu0 0
        %1338 = vmatprep.subr.bf16.mxu0 0
        %1339 = vmatpush1.bf16.xpose.msra.mxu0 0
        %1340 = vmatprep.subr.bf16.mxu0 0
        %1341 = vmatpush1.bf16.xpose.msra.mxu0 0
        %1342 = vmatprep.subr.bf16.mxu0 0
        %1343 = vmatpush1.bf16.xpose.msra.mxu0 0
        %1344 = vmatprep.subr.bf16.mxu0 0
        %1345 = vmatpush1.bf16.xpose.msra.mxu0 0
        %1346 = vmatprep.subr.bf16.mxu0 0
        %1347 = vmatpush1.bf16.xpose.msra.mxu0 0
        %1348 = vmatprep.subr.bf16.mxu0 0
        %1349 = vmatpush1.bf16.xpose.msra.mxu0 0
        %1350 = vmatprep.subr.bf16.mxu0 0
        %1351 = vmatpush1.bf16.xpose.msra.mxu0 0
        %1352 = vmatprep.subr.bf16.mxu0 0
        %1353 = vmatpush1.bf16.xpose.msra.mxu0 0
        %1354 = vmatprep.mubr.bf16.mxu0 0
        %1355 = vmatmul.mubr.bf16.gmra.mrb[0].mxu0 %v1317
        %v1356 = vpop.f32.mrb[0].mxu0
        %v1357 = vadd.f32 %v1025, %v1356
        %v1358 = vpop.f32.mrb[0].mxu0
        %v1359 = vpop.f32.mrb[0].mxu0
        %v1360 = vadd.f32 %v1026, %v1359
        %v1361 = vpop.f32.mrb[0].mxu0
        %1362 = vdwg.mxu0
        %v1363 = vsel %vm1122, %v1304, -inf
        %1364 = vmax.xlane.f32.xlu0 %v1363
        %v1365 = vpop.xlane.xlu0 %1364
        %v1366 = vsel %vm1122, %v1307, -inf
        %1367 = vmax.xlane.f32.xlu0 %v1366
        %v1368 = vpop.xlane.xlu0 %1367
        %v1369 = vsel %vm1122, %v1357, -inf
        %1370 = vmax.xlane.f32.xlu0 %v1369
        %v1371 = vpop.xlane.xlu0 %1370
        %v1372 = vsel %vm1122, %v1360, -inf
        %1373 = vmax.xlane.f32.xlu0 %v1372
        %v1374 = vpop.xlane.xlu0 %1373
        %v1375 = vsub.f32 %v1304, %v1365
        %v1376 = vsub.f32 %v1307, %v1368
        %v1377 = vsub.f32 %v1357, %v1371
        %v1378 = vsub.f32 %v1360, %v1374
        %v1379 = vmul.f32 %v1375, 1.442695
        %v1380 = vpow.pop %v1379
        %v1381 = vmul.f32 %v1376, 1.442695
        %v1382 = vpow.pop %v1381
        %v1383 = vmul.f32 %v1377, 1.442695
        %v1384 = vpow.pop %v1383
        %v1385 = vmul.f32 %v1378, 1.442695
        %v1386 = vpow.pop %v1385
        %v1387 = vsel %vm1122, %v1380, 0.0
        %1388 = vadd.xlane.f32.xlu0 %v1387
        %v1389 = vpop.xlane.xlu0 %1388
        %v1390 = vsel %vm1122, %v1382, 0.0
        %1391 = vadd.xlane.f32.xlu0 %v1390
        %v1392 = vpop.xlane.xlu0 %1391
        %v1393 = vsel %vm1122, %v1384, 0.0
        %1394 = vadd.xlane.f32.xlu0 %v1393
        %v1395 = vpop.xlane.xlu0 %1394
        %v1396 = vsel %vm1122, %v1386, 0.0
        %1397 = vadd.xlane.f32.xlu0 %v1396
        %v1398 = vpop.xlane.xlu0 %1397
        %v1399 = vrcp.pop %v1389
        %v1400 = vrcp.pop %v1392
        %v1401 = vrcp.pop %v1395
        %v1402 = vrcp.pop %v1398
        %v1403 = vmul.f32 %v1380, %v1399
        %v1404 = vmul.f32 %v1382, %v1400
        %v1405 = vmul.f32 %v1384, %v1401
        %v1406 = vmul.f32 %v1386, %v1402
        %v1407 = vpack.c.bf16 %v1404, %v1403
        %v1408 = vpack.c.bf16 %v1406, %v1405
        %1410 = vrot.lane.b32.xlu0 %v1023, 64
        %v1411 = vpop.permute.xlu0 %1410
        %v1414 = vsel %vm1122, %v1407, 0
        %1416 = vmatprep.subr.bf16.mxu0 0
        %1417 = vmatpush1.bf16.msra.mxu0 %v1411
        %1418 = vmatprep.subr.bf16.mxu0 0
        %1419 = vmatpush1.bf16.msra.mxu0 0
        %1420 = vmatprep.subr.bf16.mxu0 0
        %1421 = vmatpush1.bf16.msra.mxu0 0
        %1422 = vmatprep.subr.bf16.mxu0 0
        %1423 = vmatpush1.bf16.msra.mxu0 0
        %1424 = vmatprep.subr.bf16.mxu0 0
        %1425 = vmatpush1.bf16.msra.mxu0 0
        %1426 = vmatprep.subr.bf16.mxu0 0
        %1427 = vmatpush1.bf16.msra.mxu0 0
        %1428 = vmatprep.subr.bf16.mxu0 0
        %1429 = vmatpush1.bf16.msra.mxu0 0
        %1430 = vmatprep.subr.bf16.mxu0 0
        %1431 = vmatpush1.bf16.msra.mxu0 0
        %1432 = vmatprep.subr.bf16.mxu0 0
        %1433 = vmatpush1.bf16.msra.mxu0 0
        %1434 = vmatprep.subr.bf16.mxu0 0
        %1435 = vmatpush1.bf16.msra.mxu0 0
        %1436 = vmatprep.subr.bf16.mxu0 0
        %1437 = vmatpush1.bf16.msra.mxu0 0
        %1438 = vmatprep.subr.bf16.mxu0 0
        %1439 = vmatpush1.bf16.msra.mxu0 0
        %1440 = vmatprep.subr.bf16.mxu0 0
        %1441 = vmatpush1.bf16.msra.mxu0 0
        %1442 = vmatprep.subr.bf16.mxu0 0
        %1443 = vmatpush1.bf16.msra.mxu0 0
        %1444 = vmatprep.subr.bf16.mxu0 0
        %1445 = vmatpush1.bf16.msra.mxu0 0
        %1446 = vmatprep.subr.bf16.mxu0 0
        %1447 = vmatpush1.bf16.msra.mxu0 0
        %1448 = vmatprep.mubr.bf16.mxu0 0
        %1449 = vmatmul.mubr.bf16.gmra.mrb[0].mxu0 %v1414
        %v1450 = vpop.f32.mrb[0].mxu0
        %v1451 = vadd.f32 0.0, %v1450
        %v1452 = vpop.f32.mrb[0].mxu0
        %v1453 = vpop.f32.mrb[0].mxu0
        %v1454 = vadd.f32 0.0, %v1453
        %v1455 = vpop.f32.mrb[0].mxu0
        %1456 = vdwg.mxu0
        %1458 = vrot.lane.b32.xlu0 %v1024, 64
        %v1459 = vpop.permute.xlu0 %1458
        %v1462 = vsel %vm1122, %v1408, 0
        %1464 = vmatprep.subr.bf16.mxu0 0
        %1465 = vmatpush1.bf16.msra.mxu0 %v1459
        %1466 = vmatprep.subr.bf16.mxu0 0
        %1467 = vmatpush1.bf16.msra.mxu0 0
        %1468 = vmatprep.subr.bf16.mxu0 0
        %1469 = vmatpush1.bf16.msra.mxu0 0
        %1470 = vmatprep.subr.bf16.mxu0 0
        %1471 = vmatpush1.bf16.msra.mxu0 0
        %1472 = vmatprep.subr.bf16.mxu0 0
        %1473 = vmatpush1.bf16.msra.mxu0 0
        %1474 = vmatprep.subr.bf16.mxu0 0
        %1475 = vmatpush1.bf16.msra.mxu0 0
        %1476 = vmatprep.subr.bf16.mxu0 0
        %1477 = vmatpush1.bf16.msra.mxu0 0
        %1478 = vmatprep.subr.bf16.mxu0 0
        %1479 = vmatpush1.bf16.msra.mxu0 0
        %1480 = vmatprep.subr.bf16.mxu0 0
        %1481 = vmatpush1.bf16.msra.mxu0 0
        %1482 = vmatprep.subr.bf16.mxu0 0
        %1483 = vmatpush1.bf16.msra.mxu0 0
        %1484 = vmatprep.subr.bf16.mxu0 0
        %1485 = vmatpush1.bf16.msra.mxu0 0
        %1486 = vmatprep.subr.bf16.mxu0 0
        %1487 = vmatpush1.bf16.msra.mxu0 0
        %1488 = vmatprep.subr.bf16.mxu0 0
        %1489 = vmatpush1.bf16.msra.mxu0 0
        %1490 = vmatprep.subr.bf16.mxu0 0
        %1491 = vmatpush1.bf16.msra.mxu0 0
        %1492 = vmatprep.subr.bf16.mxu0 0
        %1493 = vmatpush1.bf16.msra.mxu0 0
        %1494 = vmatprep.subr.bf16.mxu0 0
        %1495 = vmatpush1.bf16.msra.mxu0 0
        %1496 = vmatprep.mubr.bf16.mxu0 0
        %1497 = vmatmul.mubr.bf16.gmra.mrb[0].mxu0 %v1462
        %v1498 = vpop.f32.mrb[0].mxu0
        %v1499 = vadd.f32 0.0, %v1498
        %v1500 = vpop.f32.mrb[0].mxu0
        %v1501 = vpop.f32.mrb[0].mxu0
        %v1502 = vadd.f32 0.0, %v1501
        %v1503 = vpop.f32.mrb[0].mxu0
        %1504 = vdwg.mxu0
        %1509 = vrot.lane.b32.xlu0 %v1451, 64
        %v1510 = vpop.permute.xlu0 %1509
        %1511 = vrot.lane.b32.xlu0 %v1454, 64
        %v1512 = vpop.permute.xlu0 %1511
        %1513 = vrot.lane.b32.xlu0 %v1499, 64
        %v1514 = vpop.permute.xlu0 %1513
        %1515 = vrot.lane.b32.xlu0 %v1502, 64
        %v1516 = vpop.permute.xlu0 %1515
        %v1521 = vsel %vm1027, %v1207, %v1510
        %v1522 = vsel %vm1027, %v1210, %v1512
        %v1523 = vsel %vm1027, %v1251, %v1514
        %v1524 = vsel %vm1027, %v1254, %v1516
        %v1525 = vpack.c.bf16 %v1522, %v1521
        %v1526 = vpack.c.bf16 %v1524, %v1523
        %v1527 = vld [vmem:[%s692] sm:$0xf]
        %v1528 = vld [vmem:[%s692 + $0x4] sm:$0xf]
        %v1529 = vld [vmem:[%s692 + $0x8] sm:$0xf]
        %v1530 = vld [vmem:[%s692 + $0xc] sm:$0xf]
        %v1531 = vld [vmem:[%s692 + $0x10] sm:$0xf]
        %v1532 = vld [vmem:[%s692 + $0x14] sm:$0xf]
        %v1533 = vld [vmem:[%s692 + $0x18] sm:$0xf]
        %v1534 = vld [vmem:[%s692 + $0x1c] sm:$0xf]
        %v1535 = vld [vmem:[%s692 + $0x20] sm:$0xf]
        %v1536 = vld [vmem:[%s692 + $0x24] sm:$0xf]
        %v1537 = vld [vmem:[%s692 + $0x28] sm:$0xf]
        %v1538 = vld [vmem:[%s692 + $0x2c] sm:$0xf]
        %v1539 = vld [vmem:[%s692 + $0x30] sm:$0xf]
        %v1540 = vld [vmem:[%s692 + $0x34] sm:$0xf]
        %v1541 = vld [vmem:[%s692 + $0x38] sm:$0xf]
        %v1542 = vld [vmem:[%s692 + $0x3c] sm:$0xf]
        %v1543 = vld [vmem:[%s695] sm:$0x1]
        %v1545 = vlaneseq
        %v1546 = vshrl.u32 %v1545, 7
        %v1547 = vsub.s32 0, %v1546
        %v1548 = vrot.slane %v1543, %v1547
        %v1566 = vunpack.c.l.b16 %v1527
        %v1567 = vunpack.c.l.b16 %v1528
        %v1568 = vunpack.c.l.b16 %v1529
        %v1569 = vunpack.c.l.b16 %v1530
        %v1570 = vunpack.c.l.b16 %v1531
        %v1571 = vunpack.c.l.b16 %v1532
        %v1572 = vunpack.c.l.b16 %v1533
        %v1573 = vunpack.c.l.b16 %v1534
        %v1574 = vunpack.c.l.b16 %v1535
        %v1575 = vunpack.c.l.b16 %v1536
        %v1576 = vunpack.c.l.b16 %v1537
        %v1577 = vunpack.c.l.b16 %v1538
        %v1578 = vunpack.c.l.b16 %v1539
        %v1579 = vunpack.c.l.b16 %v1540
        %v1580 = vunpack.c.l.b16 %v1541
        %v1581 = vunpack.c.l.b16 %v1542
        %v1582 = vpack.c.b16 %v1567, %v1566
        %v1583 = vpack.c.b16 %v1569, %v1568
        %v1584 = vpack.c.b16 %v1571, %v1570
        %v1585 = vpack.c.b16 %v1573, %v1572
        %v1586 = vpack.c.b16 %v1575, %v1574
        %v1587 = vpack.c.b16 %v1577, %v1576
        %v1588 = vpack.c.b16 %v1579, %v1578
        %v1589 = vpack.c.b16 %v1581, %v1580
        %1598 = vmatprep.subr.bf16.mxu0 0
        %1599 = vmatpush1.bf16.msra.mxu0 %v1582
        %1600 = vmatprep.subr.bf16.mxu0 0
        %1601 = vmatpush1.bf16.msra.mxu0 %v1583
        %1602 = vmatprep.subr.bf16.mxu0 0
        %1603 = vmatpush1.bf16.msra.mxu0 %v1584
        %1604 = vmatprep.subr.bf16.mxu0 0
        %1605 = vmatpush1.bf16.msra.mxu0 %v1585
        %1606 = vmatprep.subr.bf16.mxu0 0
        %1607 = vmatpush1.bf16.msra.mxu0 %v1586
        %1608 = vmatprep.subr.bf16.mxu0 0
        %1609 = vmatpush1.bf16.msra.mxu0 %v1587
        %1610 = vmatprep.subr.bf16.mxu0 0
        %1611 = vmatpush1.bf16.msra.mxu0 %v1588
        %1612 = vmatprep.subr.bf16.mxu0 0
        %1613 = vmatpush1.bf16.msra.mxu0 %v1589
        %1614 = vmatprep.subr.bf16.mxu0 0
        %1615 = vmatpush1.bf16.msra.mxu0 0
        %1616 = vmatprep.subr.bf16.mxu0 0
        %1617 = vmatpush1.bf16.msra.mxu0 0
        %1618 = vmatprep.subr.bf16.mxu0 0
        %1619 = vmatpush1.bf16.msra.mxu0 0
        %1620 = vmatprep.subr.bf16.mxu0 0
        %1621 = vmatpush1.bf16.msra.mxu0 0
        %1622 = vmatprep.subr.bf16.mxu0 0
        %1623 = vmatpush1.bf16.msra.mxu0 0
        %1624 = vmatprep.subr.bf16.mxu0 0
        %1625 = vmatpush1.bf16.msra.mxu0 0
        %1626 = vmatprep.subr.bf16.mxu0 0
        %1627 = vmatpush1.bf16.msra.mxu0 0
        %1628 = vmatprep.subr.bf16.mxu0 0
        %1629 = vmatpush1.bf16.msra.mxu0 0
        %1630 = vmatprep.mubr.bf16.mxu0 0
        %1631 = vmatmul.mubr.bf16.gmra.mrb[0].mxu0 %v1525
        %v1632 = vpop.f32.mrb[0].mxu0
        %v1633 = vadd.f32 %v1548, %v1632
        %v1634 = vpop.f32.mrb[0].mxu0
        %v1635 = vpop.f32.mrb[0].mxu0
        %v1636 = vadd.f32 %v1548, %v1635
        %v1637 = vpop.f32.mrb[0].mxu0
        %1638 = vmatprep.mubr.bf16.mxu0 0
        %1639 = vmatmul.mubr.bf16.gmra.mrb[0].mxu0 %v1526
        %v1640 = vpop.f32.mrb[0].mxu0
        %v1641 = vadd.f32 %v1548, %v1640
        %v1642 = vpop.f32.mrb[0].mxu0
        %v1643 = vpop.f32.mrb[0].mxu0
        %v1644 = vadd.f32 %v1548, %v1643
        %v1645 = vpop.f32.mrb[0].mxu0
        %1646 = vdwg.mxu0
        %v1647 = vadd.f32 %v734, %v1633
        %v1648 = vadd.f32 %v735, %v1636
        %v1649 = vadd.f32 %v736, %v1641
        %v1650 = vadd.f32 %v737, %v1644
        %v1651 = vld [vmem:[%s705] sm:$0x1]
        %v1652 = vld [vmem:[%s708] sm:$0x1]
        %1653 = vadd.xlane.f32.xlu0 %v1647
        %v1654 = vpop.xlane.xlu0 %1653
        %1655 = vadd.xlane.f32.xlu0 %v1648
        %v1656 = vpop.xlane.xlu0 %1655
        %1657 = vadd.xlane.f32.xlu0 %v1649
        %v1658 = vpop.xlane.xlu0 %1657
        %1659 = vadd.xlane.f32.xlu0 %v1650
        %v1660 = vpop.xlane.xlu0 %1659
        %v1661 = vrcp.pop 128.0
        %v1662 = vmul.f32 %v1654, %v1661
        %v1663 = vmul.f32 %v1656, %v1661
        %v1664 = vmul.f32 %v1658, %v1661
        %v1665 = vmul.f32 %v1660, %v1661
        %v1666 = vsub.f32 %v1647, %v1662
        %v1667 = vsub.f32 %v1648, %v1663
        %v1668 = vsub.f32 %v1649, %v1664
        %v1669 = vsub.f32 %v1650, %v1665
        %v1670 = vmul.f32 %v1666, %v1666
        %v1671 = vmul.f32 %v1667, %v1667
        %v1672 = vmul.f32 %v1668, %v1668
        %v1673 = vmul.f32 %v1669, %v1669
        %1674 = vadd.xlane.f32.xlu0 %v1670
        %v1675 = vpop.xlane.xlu0 %1674
        %1676 = vadd.xlane.f32.xlu0 %v1671
        %v1677 = vpop.xlane.xlu0 %1676
        %1678 = vadd.xlane.f32.xlu0 %v1672
        %v1679 = vpop.xlane.xlu0 %1678
        %1680 = vadd.xlane.f32.xlu0 %v1673
        %v1681 = vpop.xlane.xlu0 %1680
        %v1682 = vmul.f32 %v1675, %v1661
        %v1683 = vmul.f32 %v1677, %v1661
        %v1684 = vmul.f32 %v1679, %v1661
        %v1685 = vmul.f32 %v1681, %v1661
        %v1686 = vadd.f32 %v1682, 1e-05
        %v1687 = vadd.f32 %v1683, 1e-05
        %v1688 = vadd.f32 %v1684, 1e-05
        %v1689 = vadd.f32 %v1685, 1e-05
        %v1690 = vrsqrt.pop %v1686
        %v1691 = vrsqrt.pop %v1687
        %v1692 = vrsqrt.pop %v1688
        %v1693 = vrsqrt.pop %v1689
        %v1694 = vmul.f32 %v1666, %v1690
        %v1695 = vmul.f32 %v1667, %v1691
        %v1696 = vmul.f32 %v1668, %v1692
        %v1697 = vmul.f32 %v1669, %v1693
        %v1699 = vlaneseq
        %v1700 = vshrl.u32 %v1699, 7
        %v1701 = vsub.s32 0, %v1700
        %v1702 = vrot.slane %v1651, %v1701
        %v1704 = vmul.f32 %v1694, %v1702
        %v1705 = vmul.f32 %v1695, %v1702
        %v1706 = vmul.f32 %v1696, %v1702
        %v1707 = vmul.f32 %v1697, %v1702
        %v1709 = vlaneseq
        %v1710 = vshrl.u32 %v1709, 7
        %v1711 = vsub.s32 0, %v1710
        %v1712 = vrot.slane %v1652, %v1711
        %v1714 = vadd.f32 %v1704, %v1712
        %v1715 = vadd.f32 %v1705, %v1712
        %v1716 = vadd.f32 %v1706, %v1712
        %v1717 = vadd.f32 %v1707, %v1712
        %v1718 = vpack.c.bf16 %v1715, %v1714
        %v1719 = vpack.c.bf16 %v1717, %v1716
        %v1720 = vld [vmem:[%s573] sm:$0xff]
        %v1721 = vld [vmem:[%s573 + $0x8] sm:$0xff]
        %v1722 = vld [vmem:[%s573 + $0x10] sm:$0xff]
        %v1723 = vld [vmem:[%s573 + $0x18] sm:$0xff]
        %v1724 = vld [vmem:[%s573 + $0x20] sm:$0xff]
        %v1725 = vld [vmem:[%s573 + $0x28] sm:$0xff]
        %v1726 = vld [vmem:[%s573 + $0x30] sm:$0xff]
        %v1727 = vld [vmem:[%s573 + $0x38] sm:$0xff]
        %v1728 = vld [vmem:[%s573 + $0x40] sm:$0xff]
        %v1729 = vld [vmem:[%s573 + $0x48] sm:$0xff]
        %v1730 = vld [vmem:[%s573 + $0x50] sm:$0xff]
        %v1731 = vld [vmem:[%s573 + $0x58] sm:$0xff]
        %v1732 = vld [vmem:[%s573 + $0x60] sm:$0xff]
        %v1733 = vld [vmem:[%s573 + $0x68] sm:$0xff]
        %v1734 = vld [vmem:[%s573 + $0x70] sm:$0xff]
        %v1735 = vld [vmem:[%s573 + $0x78] sm:$0xff]
        %v1736 = vld [vmem:[%s699] sm:$0x3]
        %v1738 = vlaneseq
        %v1739 = vshrl.u32 %v1738, 7
        %v1740 = vsub.s32 0, %v1739
        %v1741 = vrot.slane %v1736, %v1740
        %v1742 = vlaneseq
        %v1743 = vshrl.u32 %v1742, 7
        %v1744 = vsub.s32 1, %v1743
        %v1745 = vrot.slane %v1736, %v1744
        %v1764 = vunpack.c.l.b16 %v1720
        %v1765 = vunpack.c.h.b16 %v1720
        %v1766 = vunpack.c.l.b16 %v1721
        %v1767 = vunpack.c.h.b16 %v1721
        %v1768 = vunpack.c.l.b16 %v1722
        %v1769 = vunpack.c.h.b16 %v1722
        %v1770 = vunpack.c.l.b16 %v1723
        %v1771 = vunpack.c.h.b16 %v1723
        %v1772 = vunpack.c.l.b16 %v1724
        %v1773 = vunpack.c.h.b16 %v1724
        %v1774 = vunpack.c.l.b16 %v1725
        %v1775 = vunpack.c.h.b16 %v1725
        %v1776 = vunpack.c.l.b16 %v1726
        %v1777 = vunpack.c.h.b16 %v1726
        %v1778 = vunpack.c.l.b16 %v1727
        %v1779 = vunpack.c.h.b16 %v1727
        %v1780 = vunpack.c.l.b16 %v1728
        %v1781 = vunpack.c.h.b16 %v1728
        %v1782 = vunpack.c.l.b16 %v1729
        %v1783 = vunpack.c.h.b16 %v1729
        %v1784 = vunpack.c.l.b16 %v1730
        %v1785 = vunpack.c.h.b16 %v1730
        %v1786 = vunpack.c.l.b16 %v1731
        %v1787 = vunpack.c.h.b16 %v1731
        %v1788 = vunpack.c.l.b16 %v1732
        %v1789 = vunpack.c.h.b16 %v1732
        %v1790 = vunpack.c.l.b16 %v1733
        %v1791 = vunpack.c.h.b16 %v1733
        %v1792 = vunpack.c.l.b16 %v1734
        %v1793 = vunpack.c.h.b16 %v1734
        %v1794 = vunpack.c.l.b16 %v1735
        %v1795 = vunpack.c.h.b16 %v1735
        %v1796 = vpack.c.b16 %v1766, %v1764
        %v1797 = vpack.c.b16 %v1767, %v1765
        %v1798 = vpack.c.b16 %v1770, %v1768
        %v1799 = vpack.c.b16 %v1771, %v1769
        %v1800 = vpack.c.b16 %v1774, %v1772
        %v1801 = vpack.c.b16 %v1775, %v1773
        %v1802 = vpack.c.b16 %v1778, %v1776
        %v1803 = vpack.c.b16 %v1779, %v1777
        %v1804 = vpack.c.b16 %v1782, %v1780
        %v1805 = vpack.c.b16 %v1783, %v1781
        %v1806 = vpack.c.b16 %v1786, %v1784
        %v1807 = vpack.c.b16 %v1787, %v1785
        %v1808 = vpack.c.b16 %v1790, %v1788
        %v1809 = vpack.c.b16 %v1791, %v1789
        %v1810 = vpack.c.b16 %v1794, %v1792
        %v1811 = vpack.c.b16 %v1795, %v1793
        %1828 = vmatprep.subr.bf16.mxu0 %v1797
        %1829 = vmatpush1.bf16.msra.mxu0 %v1796
        %1830 = vmatprep.subr.bf16.mxu0 %v1799
        %1831 = vmatpush1.bf16.msra.mxu0 %v1798
        %1832 = vmatprep.subr.bf16.mxu0 %v1801
        %1833 = vmatpush1.bf16.msra.mxu0 %v1800
        %1834 = vmatprep.subr.bf16.mxu0 %v1803
        %1835 = vmatpush1.bf16.msra.mxu0 %v1802
        %1836 = vmatprep.subr.bf16.mxu0 %v1805
        %1837 = vmatpush1.bf16.msra.mxu0 %v1804
        %1838 = vmatprep.subr.bf16.mxu0 %v1807
        %1839 = vmatpush1.bf16.msra.mxu0 %v1806
        %1840 = vmatprep.subr.bf16.mxu0 %v1809
        %1841 = vmatpush1.bf16.msra.mxu0 %v1808
        %1842 = vmatprep.subr.bf16.mxu0 %v1811
        %1843 = vmatpush1.bf16.msra.mxu0 %v1810
        %1844 = vmatprep.subr.bf16.mxu0 0
        %1845 = vmatpush1.bf16.msra.mxu0 0
        %1846 = vmatprep.subr.bf16.mxu0 0
        %1847 = vmatpush1.bf16.msra.mxu0 0
        %1848 = vmatprep.subr.bf16.mxu0 0
        %1849 = vmatpush1.bf16.msra.mxu0 0
        %1850 = vmatprep.subr.bf16.mxu0 0
        %1851 = vmatpush1.bf16.msra.mxu0 0
        %1852 = vmatprep.subr.bf16.mxu0 0
        %1853 = vmatpush1.bf16.msra.mxu0 0
        %1854 = vmatprep.subr.bf16.mxu0 0
        %1855 = vmatpush1.bf16.msra.mxu0 0
        %1856 = vmatprep.subr.bf16.mxu0 0
        %1857 = vmatpush1.bf16.msra.mxu0 0
        %1858 = vmatprep.subr.bf16.mxu0 0
        %1859 = vmatpush1.bf16.msra.mxu0 0
        %1860 = vmatprep.mubr.bf16.mxu0 0
        %1861 = vmatmul.mubr.bf16.gmra.mrb[0].mxu0 %v1718
        %v1862 = vpop.f32.mrb[0].mxu0
        %v1863 = vadd.f32 %v1741, %v1862
        %v1864 = vpop.f32.mrb[0].mxu0
        %v1865 = vadd.f32 %v1745, %v1864
        %v1866 = vpop.f32.mrb[0].mxu0
        %v1867 = vadd.f32 %v1741, %v1866
        %v1868 = vpop.f32.mrb[0].mxu0
        %v1869 = vadd.f32 %v1745, %v1868
        %1870 = vmatprep.mubr.bf16.mxu0 0
        %1871 = vmatmul.mubr.bf16.gmra.mrb[0].mxu0 %v1719
        %v1872 = vpop.f32.mrb[0].mxu0
        %v1873 = vadd.f32 %v1741, %v1872
        %v1874 = vpop.f32.mrb[0].mxu0
        %v1875 = vadd.f32 %v1745, %v1874
        %v1876 = vpop.f32.mrb[0].mxu0
        %v1877 = vadd.f32 %v1741, %v1876
        %v1878 = vpop.f32.mrb[0].mxu0
        %v1879 = vadd.f32 %v1745, %v1878
        %1880 = vdwg.mxu0
        %v1881 = vmax.f32 %v1863, 0.0
        %v1882 = vmax.f32 %v1865, 0.0
        %v1883 = vmax.f32 %v1867, 0.0
        %v1884 = vmax.f32 %v1869, 0.0
        %v1885 = vmax.f32 %v1873, 0.0
        %v1886 = vmax.f32 %v1875, 0.0
        %v1887 = vmax.f32 %v1877, 0.0
        %v1888 = vmax.f32 %v1879, 0.0
        %v1889 = vpack.c.bf16 %v1883, %v1881
        %v1890 = vpack.c.bf16 %v1884, %v1882
        %v1891 = vpack.c.bf16 %v1887, %v1885
        %v1892 = vpack.c.bf16 %v1888, %v1886
        %v1893 = vld [vmem:[%s582] sm:$0xf]
        %v1894 = vld [vmem:[%s582 + $0x4] sm:$0xf]
        %v1895 = vld [vmem:[%s582 + $0x8] sm:$0xf]
        %v1896 = vld [vmem:[%s582 + $0xc] sm:$0xf]
        %v1897 = vld [vmem:[%s582 + $0x10] sm:$0xf]
        %v1898 = vld [vmem:[%s582 + $0x14] sm:$0xf]
        %v1899 = vld [vmem:[%s582 + $0x18] sm:$0xf]
        %v1900 = vld [vmem:[%s582 + $0x1c] sm:$0xf]
        %v1901 = vld [vmem:[%s582 + $0x20] sm:$0xf]
        %v1902 = vld [vmem:[%s582 + $0x24] sm:$0xf]
        %v1903 = vld [vmem:[%s582 + $0x28] sm:$0xf]
        %v1904 = vld [vmem:[%s582 + $0x2c] sm:$0xf]
        %v1905 = vld [vmem:[%s582 + $0x30] sm:$0xf]
        %v1906 = vld [vmem:[%s582 + $0x34] sm:$0xf]
        %v1907 = vld [vmem:[%s582 + $0x38] sm:$0xf]
        %v1908 = vld [vmem:[%s582 + $0x3c] sm:$0xf]
        %v1909 = vld [vmem:[%s582 + $0x40] sm:$0xf]
        %v1910 = vld [vmem:[%s582 + $0x44] sm:$0xf]
        %v1911 = vld [vmem:[%s582 + $0x48] sm:$0xf]
        %v1912 = vld [vmem:[%s582 + $0x4c] sm:$0xf]
        %v1913 = vld [vmem:[%s582 + $0x50] sm:$0xf]
        %v1914 = vld [vmem:[%s582 + $0x54] sm:$0xf]
        %v1915 = vld [vmem:[%s582 + $0x58] sm:$0xf]
        %v1916 = vld [vmem:[%s582 + $0x5c] sm:$0xf]
        %v1917 = vld [vmem:[%s582 + $0x60] sm:$0xf]
        %v1918 = vld [vmem:[%s582 + $0x64] sm:$0xf]
        %v1919 = vld [vmem:[%s582 + $0x68] sm:$0xf]
        %v1920 = vld [vmem:[%s582 + $0x6c] sm:$0xf]
        %v1921 = vld [vmem:[%s582 + $0x70] sm:$0xf]
        %v1922 = vld [vmem:[%s582 + $0x74] sm:$0xf]
        %v1923 = vld [vmem:[%s582 + $0x78] sm:$0xf]
        %v1924 = vld [vmem:[%s582 + $0x7c] sm:$0xf]
        %v1925 = vld [vmem:[%s702] sm:$0x1]
        %v1927 = vlaneseq
        %v1928 = vshrl.u32 %v1927, 7
        %v1929 = vsub.s32 0, %v1928
        %v1930 = vrot.slane %v1925, %v1929
        %v1964 = vunpack.c.l.b16 %v1893
        %v1965 = vunpack.c.l.b16 %v1894
        %v1966 = vunpack.c.l.b16 %v1895
        %v1967 = vunpack.c.l.b16 %v1896
        %v1968 = vunpack.c.l.b16 %v1897
        %v1969 = vunpack.c.l.b16 %v1898
        %v1970 = vunpack.c.l.b16 %v1899
        %v1971 = vunpack.c.l.b16 %v1900
        %v1972 = vunpack.c.l.b16 %v1901
        %v1973 = vunpack.c.l.b16 %v1902
        %v1974 = vunpack.c.l.b16 %v1903
        %v1975 = vunpack.c.l.b16 %v1904
        %v1976 = vunpack.c.l.b16 %v1905
        %v1977 = vunpack.c.l.b16 %v1906
        %v1978 = vunpack.c.l.b16 %v1907
        %v1979 = vunpack.c.l.b16 %v1908
        %v1980 = vunpack.c.l.b16 %v1909
        %v1981 = vunpack.c.l.b16 %v1910
        %v1982 = vunpack.c.l.b16 %v1911
        %v1983 = vunpack.c.l.b16 %v1912
        %v1984 = vunpack.c.l.b16 %v1913
        %v1985 = vunpack.c.l.b16 %v1914
        %v1986 = vunpack.c.l.b16 %v1915
        %v1987 = vunpack.c.l.b16 %v1916
        %v1988 = vunpack.c.l.b16 %v1917
        %v1989 = vunpack.c.l.b16 %v1918
        %v1990 = vunpack.c.l.b16 %v1919
        %v1991 = vunpack.c.l.b16 %v1920
        %v1992 = vunpack.c.l.b16 %v1921
        %v1993 = vunpack.c.l.b16 %v1922
        %v1994 = vunpack.c.l.b16 %v1923
        %v1995 = vunpack.c.l.b16 %v1924
        %v1996 = vpack.c.b16 %v1965, %v1964
        %v1997 = vpack.c.b16 %v1967, %v1966
        %v1998 = vpack.c.b16 %v1969, %v1968
        %v1999 = vpack.c.b16 %v1971, %v1970
        %v2000 = vpack.c.b16 %v1973, %v1972
        %v2001 = vpack.c.b16 %v1975, %v1974
        %v2002 = vpack.c.b16 %v1977, %v1976
        %v2003 = vpack.c.b16 %v1979, %v1978
        %v2004 = vpack.c.b16 %v1981, %v1980
        %v2005 = vpack.c.b16 %v1983, %v1982
        %v2006 = vpack.c.b16 %v1985, %v1984
        %v2007 = vpack.c.b16 %v1987, %v1986
        %v2008 = vpack.c.b16 %v1989, %v1988
        %v2009 = vpack.c.b16 %v1991, %v1990
        %v2010 = vpack.c.b16 %v1993, %v1992
        %v2011 = vpack.c.b16 %v1995, %v1994
        %2028 = vmatprep.subr.bf16.mxu0 0
        %2029 = vmatpush1.bf16.msra.mxu0 %v1996
        %2030 = vmatprep.subr.bf16.mxu0 0
        %2031 = vmatpush1.bf16.msra.mxu0 %v1997
        %2032 = vmatprep.subr.bf16.mxu0 0
        %2033 = vmatpush1.bf16.msra.mxu0 %v1998
        %2034 = vmatprep.subr.bf16.mxu0 0
        %2035 = vmatpush1.bf16.msra.mxu0 %v1999
        %2036 = vmatprep.subr.bf16.mxu0 0
        %2037 = vmatpush1.bf16.msra.mxu0 %v2000
        %2038 = vmatprep.subr.bf16.mxu0 0
        %2039 = vmatpush1.bf16.msra.mxu0 %v2001
        %2040 = vmatprep.subr.bf16.mxu0 0
        %2041 = vmatpush1.bf16.msra.mxu0 %v2002
        %2042 = vmatprep.subr.bf16.mxu0 0
        %2043 = vmatpush1.bf16.msra.mxu0 %v2003
        %2044 = vmatprep.subr.bf16.mxu0 0
        %2045 = vmatpush1.bf16.msra.mxu0 %v2004
        %2046 = vmatprep.subr.bf16.mxu0 0
        %2047 = vmatpush1.bf16.msra.mxu0 %v2005
        %2048 = vmatprep.subr.bf16.mxu0 0
        %2049 = vmatpush1.bf16.msra.mxu0 %v2006
        %2050 = vmatprep.subr.bf16.mxu0 0
        %2051 = vmatpush1.bf16.msra.mxu0 %v2007
        %2052 = vmatprep.subr.bf16.mxu0 0
        %2053 = vmatpush1.bf16.msra.mxu0 %v2008
        %2054 = vmatprep.subr.bf16.mxu0 0
        %2055 = vmatpush1.bf16.msra.mxu0 %v2009
        %2056 = vmatprep.subr.bf16.mxu0 0
        %2057 = vmatpush1.bf16.msra.mxu0 %v2010
        %2058 = vmatprep.subr.bf16.mxu0 0
        %2059 = vmatpush1.bf16.msra.mxu0 %v2011
        %2060 = vmatprep.mubr.bf16.mxu0 %v1890
        %2061 = vmatmul.mubr.bf16.gmra.mrb[0].mxu0 %v1889
        %v2062 = vpop.f32.mrb[0].mxu0
        %v2063 = vadd.f32 %v1930, %v2062
        %v2064 = vpop.f32.mrb[0].mxu0
        %v2065 = vpop.f32.mrb[0].mxu0
        %v2066 = vadd.f32 %v1930, %v2065
        %v2067 = vpop.f32.mrb[0].mxu0
        %2068 = vmatprep.mubr.bf16.mxu0 %v1892
        %2069 = vmatmul.mubr.bf16.gmra.mrb[0].mxu0 %v1891
        %v2070 = vpop.f32.mrb[0].mxu0
        %v2071 = vadd.f32 %v1930, %v2070
        %v2072 = vpop.f32.mrb[0].mxu0
        %v2073 = vpop.f32.mrb[0].mxu0
        %v2074 = vadd.f32 %v1930, %v2073
        %v2075 = vpop.f32.mrb[0].mxu0
        %2076 = vdwg.mxu0
        %v2077 = vadd.f32 %v1714, %v2063
        %v2078 = vadd.f32 %v1715, %v2066
        %v2079 = vadd.f32 %v1716, %v2071
        %v2080 = vadd.f32 %v1717, %v2074
        %v2081 = vld [vmem:[%s711] sm:$0x1]
        %v2082 = vld [vmem:[%s714] sm:$0x1]
        %2083 = vadd.xlane.f32.xlu0 %v2077
        %v2084 = vpop.xlane.xlu0 %2083
        %2085 = vadd.xlane.f32.xlu0 %v2078
        %v2086 = vpop.xlane.xlu0 %2085
        %2087 = vadd.xlane.f32.xlu0 %v2079
        %v2088 = vpop.xlane.xlu0 %2087
        %2089 = vadd.xlane.f32.xlu0 %v2080
        %v2090 = vpop.xlane.xlu0 %2089
        %v2091 = vmul.f32 %v2084, %v1661
        %v2092 = vmul.f32 %v2086, %v1661
        %v2093 = vmul.f32 %v2088, %v1661
        %v2094 = vmul.f32 %v2090, %v1661
        %v2095 = vsub.f32 %v2077, %v2091
        %v2096 = vsub.f32 %v2078, %v2092
        %v2097 = vsub.f32 %v2079, %v2093
        %v2098 = vsub.f32 %v2080, %v2094
        %v2099 = vmul.f32 %v2095, %v2095
        %v2100 = vmul.f32 %v2096, %v2096
        %v2101 = vmul.f32 %v2097, %v2097
        %v2102 = vmul.f32 %v2098, %v2098
        %2103 = vadd.xlane.f32.xlu0 %v2099
        %v2104 = vpop.xlane.xlu0 %2103
        %2105 = vadd.xlane.f32.xlu0 %v2100
        %v2106 = vpop.xlane.xlu0 %2105
        %2107 = vadd.xlane.f32.xlu0 %v2101
        %v2108 = vpop.xlane.xlu0 %2107
        %2109 = vadd.xlane.f32.xlu0 %v2102
        %v2110 = vpop.xlane.xlu0 %2109
        %v2111 = vmul.f32 %v2104, %v1661
        %v2112 = vmul.f32 %v2106, %v1661
        %v2113 = vmul.f32 %v2108, %v1661
        %v2114 = vmul.f32 %v2110, %v1661
        %v2115 = vadd.f32 %v2111, 1e-05
        %v2116 = vadd.f32 %v2112, 1e-05
        %v2117 = vadd.f32 %v2113, 1e-05
        %v2118 = vadd.f32 %v2114, 1e-05
        %v2119 = vrsqrt.pop %v2115
        %v2120 = vrsqrt.pop %v2116
        %v2121 = vrsqrt.pop %v2117
        %v2122 = vrsqrt.pop %v2118
        %v2123 = vmul.f32 %v2095, %v2119
        %v2124 = vmul.f32 %v2096, %v2120
        %v2125 = vmul.f32 %v2097, %v2121
        %v2126 = vmul.f32 %v2098, %v2122
        %v2128 = vlaneseq
        %v2129 = vshrl.u32 %v2128, 7
        %v2130 = vsub.s32 0, %v2129
        %v2131 = vrot.slane %v2081, %v2130
        %v2133 = vmul.f32 %v2123, %v2131
        %v2134 = vmul.f32 %v2124, %v2131
        %v2135 = vmul.f32 %v2125, %v2131
        %v2136 = vmul.f32 %v2126, %v2131
        %v2138 = vlaneseq
        %v2139 = vshrl.u32 %v2138, 7
        %v2140 = vsub.s32 0, %v2139
        %v2141 = vrot.slane %v2082, %v2140
        %v2143 = vadd.f32 %v2133, %v2141
        %v2144 = vadd.f32 %v2134, %v2141
        %v2145 = vadd.f32 %v2135, %v2141
        %v2146 = vadd.f32 %v2136, %v2141
        %2147 = vst [vmem:[%s719] sm:$0xff] %v2143
        %2148 = vst [vmem:[%s719 + $0x8] sm:$0xff] %v2144
        %2149 = vst [vmem:[%s719 + $0x10] sm:$0xff] %v2145
        %2150 = vst [vmem:[%s719 + $0x18] sm:$0xff] %v2146
        %s2151 = smul.u32 4, %s35
        %p2152 = scmp.lt.s32.totalorder %s2151, 3
        %s2153 = scalar_select %p2152, %s2151, 3
        %s2154 = smul.addr %s2153, 8
        %s2155 = scalar_lea.vmem %s14, %s2154
        // Predicated region
        $region89: #{transformer_forward.2} parent=75 // pred_check
          %p2156 = pneg %p420
        $region90: #{transformer_forward.2} parent=75 // pred_check_branch
          %2158 = sbr.rel (%p2156) target = $region92
        $region91: #{transformer_forward.2} parent=75 // pred_region
          %s2159 = smul.u32 4, %s35
        $region92: #{transformer_forward.2} parent=75 // pred_fallthru
          _
        // Predicated region
        $region93: #{transformer_forward.2} parent=75 // pred_check
          %p2160 = pneg %p420
        $region94: #{transformer_forward.2} parent=75 // pred_check_branch
          %2162 = sbr.rel (%p2160) target = $region96
        $region95: #{transformer_forward.2} parent=75 // pred_region
          %s2163 = smul.u32 4, %s35
          %p2164 = scmp.lt.s32.totalorder %s2163, 3
          %s2165 = scalar_select %p2164, %s2163, 3
          %s2166 = smul.addr %s2165, 8
          %s2167 = scalar_lea.vmem %s14, %s2166
        $region96: #{transformer_forward.2} parent=75 // pred_fallthru
          _
      $region76: #{transformer_forward.2} parent=5 // pred_fallthru
        _
      %p2168 = scmp.le.s32.totalorder 2, %s26
      // Predicated region
      $region97: #{transformer_forward.2} parent=5 // pred_check
        %p2169 = pneg %p2168
      $region98: #{transformer_forward.2} parent=5 // pred_check_branch
        %2171 = sbr.rel (%p2169) target = $region100
      $region99: #{transformer_forward.2} parent=5 // pred_region
        %s2172 = ssub.s32 %s26, 2
      $region100: #{transformer_forward.2} parent=5 // pred_fallthru
        _
    $region6: #{transformer_forward.2} parent=1 // loop_footer
      %s30 = sadd.s32 1, %s26
    $region7: #{transformer_forward.2} parent=1 // loop_footer_branch
      %25 = sbr.rel target = $region3
    $region8: #{transformer_forward.2} parent=1 // loop_exit
      _
    %2173 = vsyncpa [#allocation3], 1
    %s2174 = scalar_lea.sflag [#allocation3], 1
    %2175 = vsyncpa %s2174, 1
    %2176 = vsyncpa [#allocation5], 1
    %s2177 = scalar_lea.sflag [#allocation5], 1
    %2178 = vsyncpa %s2177, 1

</llo_original>
